<compile_context>
chip_gen: v6e
topology: v6e:2x2x1
jax: 0.10.0
libtpu: 0.0.40
codegen_flags: <defaults>
</compile_context>

<pallas_src>
import jax
import jax.numpy as jnp
from jax.experimental import pallas as pl
from jax.experimental.pallas import tpu as pltpu


def mlp_kernel(x_ref, *refs):
    """refs = (w1, b1, w2, b2, ..., w7, b7, o_ref)."""
    o_ref = refs[-1]
    wb_refs = refs[:-1]
    n_layers = len(wb_refs) // 2

    h = x_ref[...]  # bf16 (TB, in_features)
    for li in range(n_layers):
        w_ref = wb_refs[2 * li]
        b_ref = wb_refs[2 * li + 1]
        # bf16 x bf16 -> f32 accumulation on the MXU; bias add + ReLU in f32.
        y = jnp.dot(h, w_ref[...], preferred_element_type=jnp.float32) + b_ref[...]
        if li < n_layers - 1:
            h = jnp.maximum(y, 0.0).astype(jnp.bfloat16)
        else:
            h = y  # final logits layer: no ReLU
    o_ref[...] = h.astype(o_ref.dtype)


def _round_up(x, m):
    return ((x + m - 1) // m) * m


def mlp_forward(x, params, *, tb=512):
    """params: list of (w, b) with w shaped (in, out) and b shaped (1, out)."""
    batch, in_dim = x.shape
    num_classes = params[-1][0].shape[1]

    # Batch-tile size: multiple of 8 (sublane), no larger than the padded batch.
    tb = max(8, min(tb, _round_up(batch, 8)))
    padded_batch = _round_up(batch, tb)
    num_tiles = pl.cdiv(padded_batch, tb)

    # bf16 operands for the MXU; keep biases (and accumulation) in f32.
    x_in = x.astype(jnp.bfloat16)
    if padded_batch != batch:
        x_in = jnp.pad(x_in, ((0, padded_batch - batch), (0, 0)))

    flat_args = [x_in]
    in_specs = [pl.BlockSpec((tb, in_dim), lambda i: (i, 0))]
    for w, b in params:
        w_bf16 = w.astype(jnp.bfloat16)
        b_f32 = b.astype(jnp.float32)
        flat_args.append(w_bf16)
        # Weights/biases: full-array blocks, constant index_map -> VMEM-resident
        # across all grid iterations.
        in_specs.append(pl.BlockSpec(w_bf16.shape, lambda i: (0, 0)))
        flat_args.append(b_f32)
        in_specs.append(pl.BlockSpec(b_f32.shape, lambda i: (0, 0)))

    out_spec = pl.BlockSpec((tb, num_classes), lambda i: (i, 0))

    out = pl.pallas_call(
        mlp_kernel,
        out_shape=jax.ShapeDtypeStruct((padded_batch, num_classes), jnp.float32),
        grid=(num_tiles,),
        in_specs=in_specs,
        out_specs=out_spec,
        compiler_params=pltpu.CompilerParams(
            dimension_semantics=("parallel",)),
    )(*flat_args)

    return out[:batch]


def init_linear(key, fan_in, fan_out):
    """Deterministic init mimicking torch.nn.Linear default (uniform +/- 1/sqrt(fan_in))."""
    kw, kb = jax.random.split(key)
    bound = 1.0 / (fan_in ** 0.5)
    w = jax.random.uniform(kw, (fan_in, fan_out), jnp.float32, -bound, bound)
    b = jax.random.uniform(kb, (1, fan_out), jnp.float32, -bound, bound)
    return w, b


def reference_forward(x, params):
    """Pure-JAX reference mimicking the kernel's bf16-operand / f32-accumulate math."""
    h = x.astype(jnp.bfloat16)
    for i, (w, b) in enumerate(params):
        y = jnp.dot(h, w.astype(jnp.bfloat16),
                    preferred_element_type=jnp.float32) + b.astype(jnp.float32)
        if i < len(params) - 1:
            h = jnp.maximum(y, 0.0).astype(jnp.bfloat16)
        else:
            h = y
    return h


if __name__ == "__main__":
    # Small, self-consistent shapes for the MLP:
    # input_size=32, f1..f6 = 64, 64, 48, 48, 32, 32, num_classes=8
    batch = 512          # enough rows to exercise the batch grid (TB=128 -> 4 tiles)
    dims = [32, 64, 64, 48, 48, 32, 32, 8]

    key = jax.random.PRNGKey(0)
    keys = jax.random.split(key, len(dims))  # last key used for x

    params = []
    for i in range(len(dims) - 1):
        params.append(init_linear(keys[i], dims[i], dims[i + 1]))

    x = jax.random.normal(keys[-1], (batch, dims[0]), jnp.float32)

    out = mlp_forward(x, params, tb=128)
    out = jax.block_until_ready(out)

    # Correctness check against a pure-JAX reference (same bf16/f32 mixed precision).
    ref = reference_forward(x, params)
    assert out.shape == (batch, dims[-1])
    assert jnp.allclose(out, ref, atol=2e-2, rtol=2e-2), "mismatch vs reference"

    print("KERNEL_OK")
</pallas_src>

<mosaic_0001>
module attributes {stable_mosaic.version = 11 : i64} {
  func.func @mlp_kernel(%arg0: i32, %arg1: memref<128x32xbf16, #tpu.memory_space<vmem>>, %arg2: memref<32x64xbf16, #tpu.memory_space<vmem>>, %arg3: memref<1x64xf32, #tpu.memory_space<vmem>>, %arg4: memref<64x64xbf16, #tpu.memory_space<vmem>>, %arg5: memref<1x64xf32, #tpu.memory_space<vmem>>, %arg6: memref<64x48xbf16, #tpu.memory_space<vmem>>, %arg7: memref<1x48xf32, #tpu.memory_space<vmem>>, %arg8: memref<48x48xbf16, #tpu.memory_space<vmem>>, %arg9: memref<1x48xf32, #tpu.memory_space<vmem>>, %arg10: memref<48x32xbf16, #tpu.memory_space<vmem>>, %arg11: memref<1x32xf32, #tpu.memory_space<vmem>>, %arg12: memref<32x32xbf16, #tpu.memory_space<vmem>>, %arg13: memref<1x32xf32, #tpu.memory_space<vmem>>, %arg14: memref<32x8xbf16, #tpu.memory_space<vmem>>, %arg15: memref<1x8xf32, #tpu.memory_space<vmem>>, %arg16: memref<128x8xf32, #tpu.memory_space<vmem>>) attributes {dimension_semantics = [#tpu.dimension_semantics<parallel>], iteration_bounds = array<i64: 4>, scalar_prefetch = 0 : i64, scratch_operands = 0 : i64, tpu.core_type = #tpu.core_type<tc>, window_params = [{transform_indices = @transform_0, window_bounds = array<i64: 128, 32>}, {pipeline_mode = #tpu.pipeline_mode<synchronous>, transform_indices = @transform_1, window_bounds = array<i64: 32, 64>}, {pipeline_mode = #tpu.pipeline_mode<synchronous>, transform_indices = @transform_2, window_bounds = array<i64: 1, 64>}, {pipeline_mode = #tpu.pipeline_mode<synchronous>, transform_indices = @transform_3, window_bounds = array<i64: 64, 64>}, {pipeline_mode = #tpu.pipeline_mode<synchronous>, transform_indices = @transform_4, window_bounds = array<i64: 1, 64>}, {pipeline_mode = #tpu.pipeline_mode<synchronous>, transform_indices = @transform_5, window_bounds = array<i64: 64, 48>}, {pipeline_mode = #tpu.pipeline_mode<synchronous>, transform_indices = @transform_6, window_bounds = array<i64: 1, 48>}, {pipeline_mode = #tpu.pipeline_mode<synchronous>, transform_indices = @transform_7, window_bounds = array<i64: 48, 48>}, {pipeline_mode = #tpu.pipeline_mode<synchronous>, transform_indices = @transform_8, window_bounds = array<i64: 1, 48>}, {pipeline_mode = #tpu.pipeline_mode<synchronous>, transform_indices = @transform_9, window_bounds = array<i64: 48, 32>}, {pipeline_mode = #tpu.pipeline_mode<synchronous>, transform_indices = @transform_10, window_bounds = array<i64: 1, 32>}, {pipeline_mode = #tpu.pipeline_mode<synchronous>, transform_indices = @transform_11, window_bounds = array<i64: 32, 32>}, {pipeline_mode = #tpu.pipeline_mode<synchronous>, transform_indices = @transform_12, window_bounds = array<i64: 1, 32>}, {pipeline_mode = #tpu.pipeline_mode<synchronous>, transform_indices = @transform_13, window_bounds = array<i64: 32, 8>}, {pipeline_mode = #tpu.pipeline_mode<synchronous>, transform_indices = @transform_14, window_bounds = array<i64: 1, 8>}, {transform_indices = @transform_15, window_bounds = array<i64: 128, 8>}]} {
    %c0 = arith.constant 0 : index
    %c0_0 = arith.constant 0 : index
    %0 = vector.load %arg1[%c0, %c0_0] : memref<128x32xbf16, #tpu.memory_space<vmem>>, vector<128x32xbf16>
    %c0_1 = arith.constant 0 : index
    %c0_2 = arith.constant 0 : index
    %1 = vector.load %arg2[%c0_1, %c0_2] : memref<32x64xbf16, #tpu.memory_space<vmem>>, vector<32x64xbf16>
    %cst = arith.constant dense<0.000000e+00> : vector<128x64xf32>
    %2 = tpu.matmul %0, %1, %cst {dimension_numbers = #tpu.dot_dimension_numbers<[1], [0], [0], [1], [0, 0, 1, 1], [], []>} : vector<128x32xbf16>, vector<32x64xbf16>, vector<128x64xf32> -> vector<128x64xf32>
    %c0_3 = arith.constant 0 : index
    %c0_4 = arith.constant 0 : index
    %3 = vector.load %arg3[%c0_3, %c0_4] : memref<1x64xf32, #tpu.memory_space<vmem>>, vector<1x64xf32>
    %4 = vector.broadcast %3 : vector<1x64xf32> to vector<128x64xf32>
    %5 = arith.addf %2, %4 : vector<128x64xf32>
    %cst_5 = arith.constant 0.000000e+00 : f32
    %6 = vector.broadcast %cst_5 : f32 to vector<128x64xf32>
    %7 = arith.maximumf %5, %6 : vector<128x64xf32>
    %8 = arith.truncf %7 : vector<128x64xf32> to vector<128x64xbf16>
    %c0_6 = arith.constant 0 : index
    %c0_7 = arith.constant 0 : index
    %9 = vector.load %arg4[%c0_6, %c0_7] : memref<64x64xbf16, #tpu.memory_space<vmem>>, vector<64x64xbf16>
    %cst_8 = arith.constant dense<0.000000e+00> : vector<128x64xf32>
    %10 = tpu.matmul %8, %9, %cst_8 {dimension_numbers = #tpu.dot_dimension_numbers<[1], [0], [0], [1], [0, 0, 1, 1], [], []>} : vector<128x64xbf16>, vector<64x64xbf16>, vector<128x64xf32> -> vector<128x64xf32>
    %c0_9 = arith.constant 0 : index
    %c0_10 = arith.constant 0 : index
    %11 = vector.load %arg5[%c0_9, %c0_10] : memref<1x64xf32, #tpu.memory_space<vmem>>, vector<1x64xf32>
    %12 = vector.broadcast %11 : vector<1x64xf32> to vector<128x64xf32>
    %13 = arith.addf %10, %12 : vector<128x64xf32>
    %cst_11 = arith.constant 0.000000e+00 : f32
    %14 = vector.broadcast %cst_11 : f32 to vector<128x64xf32>
    %15 = arith.maximumf %13, %14 : vector<128x64xf32>
    %16 = arith.truncf %15 : vector<128x64xf32> to vector<128x64xbf16>
    %c0_12 = arith.constant 0 : index
    %c0_13 = arith.constant 0 : index
    %17 = vector.load %arg6[%c0_12, %c0_13] : memref<64x48xbf16, #tpu.memory_space<vmem>>, vector<64x48xbf16>
    %cst_14 = arith.constant dense<0.000000e+00> : vector<128x48xf32>
    %18 = tpu.matmul %16, %17, %cst_14 {dimension_numbers = #tpu.dot_dimension_numbers<[1], [0], [0], [1], [0, 0, 1, 1], [], []>} : vector<128x64xbf16>, vector<64x48xbf16>, vector<128x48xf32> -> vector<128x48xf32>
    %c0_15 = arith.constant 0 : index
    %c0_16 = arith.constant 0 : index
    %19 = vector.load %arg7[%c0_15, %c0_16] : memref<1x48xf32, #tpu.memory_space<vmem>>, vector<1x48xf32>
    %20 = vector.broadcast %19 : vector<1x48xf32> to vector<128x48xf32>
    %21 = arith.addf %18, %20 : vector<128x48xf32>
    %cst_17 = arith.constant 0.000000e+00 : f32
    %22 = vector.broadcast %cst_17 : f32 to vector<128x48xf32>
    %23 = arith.maximumf %21, %22 : vector<128x48xf32>
    %24 = arith.truncf %23 : vector<128x48xf32> to vector<128x48xbf16>
    %c0_18 = arith.constant 0 : index
    %c0_19 = arith.constant 0 : index
    %25 = vector.load %arg8[%c0_18, %c0_19] : memref<48x48xbf16, #tpu.memory_space<vmem>>, vector<48x48xbf16>
    %cst_20 = arith.constant dense<0.000000e+00> : vector<128x48xf32>
    %26 = tpu.matmul %24, %25, %cst_20 {dimension_numbers = #tpu.dot_dimension_numbers<[1], [0], [0], [1], [0, 0, 1, 1], [], []>} : vector<128x48xbf16>, vector<48x48xbf16>, vector<128x48xf32> -> vector<128x48xf32>
    %c0_21 = arith.constant 0 : index
    %c0_22 = arith.constant 0 : index
    %27 = vector.load %arg9[%c0_21, %c0_22] : memref<1x48xf32, #tpu.memory_space<vmem>>, vector<1x48xf32>
    %28 = vector.broadcast %27 : vector<1x48xf32> to vector<128x48xf32>
    %29 = arith.addf %26, %28 : vector<128x48xf32>
    %cst_23 = arith.constant 0.000000e+00 : f32
    %30 = vector.broadcast %cst_23 : f32 to vector<128x48xf32>
    %31 = arith.maximumf %29, %30 : vector<128x48xf32>
    %32 = arith.truncf %31 : vector<128x48xf32> to vector<128x48xbf16>
    %c0_24 = arith.constant 0 : index
    %c0_25 = arith.constant 0 : index
    %33 = vector.load %arg10[%c0_24, %c0_25] : memref<48x32xbf16, #tpu.memory_space<vmem>>, vector<48x32xbf16>
    %cst_26 = arith.constant dense<0.000000e+00> : vector<128x32xf32>
    %34 = tpu.matmul %32, %33, %cst_26 {dimension_numbers = #tpu.dot_dimension_numbers<[1], [0], [0], [1], [0, 0, 1, 1], [], []>} : vector<128x48xbf16>, vector<48x32xbf16>, vector<128x32xf32> -> vector<128x32xf32>
    %c0_27 = arith.constant 0 : index
    %c0_28 = arith.constant 0 : index
    %35 = vector.load %arg11[%c0_27, %c0_28] : memref<1x32xf32, #tpu.memory_space<vmem>>, vector<1x32xf32>
    %36 = vector.broadcast %35 : vector<1x32xf32> to vector<128x32xf32>
    %37 = arith.addf %34, %36 : vector<128x32xf32>
    %cst_29 = arith.constant 0.000000e+00 : f32
    %38 = vector.broadcast %cst_29 : f32 to vector<128x32xf32>
    %39 = arith.maximumf %37, %38 : vector<128x32xf32>
    %40 = arith.truncf %39 : vector<128x32xf32> to vector<128x32xbf16>
    %c0_30 = arith.constant 0 : index
    %c0_31 = arith.constant 0 : index
    %41 = vector.load %arg12[%c0_30, %c0_31] : memref<32x32xbf16, #tpu.memory_space<vmem>>, vector<32x32xbf16>
    %cst_32 = arith.constant dense<0.000000e+00> : vector<128x32xf32>
    %42 = tpu.matmul %40, %41, %cst_32 {dimension_numbers = #tpu.dot_dimension_numbers<[1], [0], [0], [1], [0, 0, 1, 1], [], []>} : vector<128x32xbf16>, vector<32x32xbf16>, vector<128x32xf32> -> vector<128x32xf32>
    %c0_33 = arith.constant 0 : index
    %c0_34 = arith.constant 0 : index
    %43 = vector.load %arg13[%c0_33, %c0_34] : memref<1x32xf32, #tpu.memory_space<vmem>>, vector<1x32xf32>
    %44 = vector.broadcast %43 : vector<1x32xf32> to vector<128x32xf32>
    %45 = arith.addf %42, %44 : vector<128x32xf32>
    %cst_35 = arith.constant 0.000000e+00 : f32
    %46 = vector.broadcast %cst_35 : f32 to vector<128x32xf32>
    %47 = arith.maximumf %45, %46 : vector<128x32xf32>
    %48 = arith.truncf %47 : vector<128x32xf32> to vector<128x32xbf16>
    %c0_36 = arith.constant 0 : index
    %c0_37 = arith.constant 0 : index
    %49 = vector.load %arg14[%c0_36, %c0_37] : memref<32x8xbf16, #tpu.memory_space<vmem>>, vector<32x8xbf16>
    %cst_38 = arith.constant dense<0.000000e+00> : vector<128x8xf32>
    %50 = tpu.matmul %48, %49, %cst_38 {dimension_numbers = #tpu.dot_dimension_numbers<[1], [0], [0], [1], [0, 0, 1, 1], [], []>} : vector<128x32xbf16>, vector<32x8xbf16>, vector<128x8xf32> -> vector<128x8xf32>
    %c0_39 = arith.constant 0 : index
    %c0_40 = arith.constant 0 : index
    %51 = vector.load %arg15[%c0_39, %c0_40] : memref<1x8xf32, #tpu.memory_space<vmem>>, vector<1x8xf32>
    %52 = vector.broadcast %51 : vector<1x8xf32> to vector<128x8xf32>
    %53 = arith.addf %50, %52 : vector<128x8xf32>
    %c0_41 = arith.constant 0 : index
    %c0_42 = arith.constant 0 : index
    %54 = vector.load %arg16[%c0_41, %c0_42] : memref<128x8xf32, #tpu.memory_space<vmem>>, vector<128x8xf32>
    tpu.vector_store %arg16[%c0_41, %c0_42], %53 {strides = array<i32>} : memref<128x8xf32, #tpu.memory_space<vmem>>, vector<128x8xf32>,
    return
  }
  func.func @transform_0(%arg0: i32) -> (i32, i32) {
    %c0_i32 = arith.constant 0 : i32
    %c0_i32_0 = arith.constant 0 : i32
    return %arg0, %c0_i32 : i32, i32
  }
  func.func @transform_1(%arg0: i32) -> (i32, i32) {
    %c0_i32 = arith.constant 0 : i32
    %c0_i32_0 = arith.constant 0 : i32
    %c0_i32_1 = arith.constant 0 : i32
    return %c0_i32, %c0_i32_0 : i32, i32
  }
  func.func @transform_2(%arg0: i32) -> (i32, i32) {
    %c0_i32 = arith.constant 0 : i32
    %c0_i32_0 = arith.constant 0 : i32
    %c0_i32_1 = arith.constant 0 : i32
    return %c0_i32, %c0_i32_0 : i32, i32
  }
  func.func @transform_3(%arg0: i32) -> (i32, i32) {
    %c0_i32 = arith.constant 0 : i32
    %c0_i32_0 = arith.constant 0 : i32
    %c0_i32_1 = arith.constant 0 : i32
    return %c0_i32, %c0_i32_0 : i32, i32
  }
  func.func @transform_4(%arg0: i32) -> (i32, i32) {
    %c0_i32 = arith.constant 0 : i32
    %c0_i32_0 = arith.constant 0 : i32
    %c0_i32_1 = arith.constant 0 : i32
    return %c0_i32, %c0_i32_0 : i32, i32
  }
  func.func @transform_5(%arg0: i32) -> (i32, i32) {
    %c0_i32 = arith.constant 0 : i32
    %c0_i32_0 = arith.constant 0 : i32
    %c0_i32_1 = arith.constant 0 : i32
    return %c0_i32, %c0_i32_0 : i32, i32
  }
  func.func @transform_6(%arg0: i32) -> (i32, i32) {
    %c0_i32 = arith.constant 0 : i32
    %c0_i32_0 = arith.constant 0 : i32
    %c0_i32_1 = arith.constant 0 : i32
    return %c0_i32, %c0_i32_0 : i32, i32
  }
  func.func @transform_7(%arg0: i32) -> (i32, i32) {
    %c0_i32 = arith.constant 0 : i32
    %c0_i32_0 = arith.constant 0 : i32
    %c0_i32_1 = arith.constant 0 : i32
    return %c0_i32, %c0_i32_0 : i32, i32
  }
  func.func @transform_8(%arg0: i32) -> (i32, i32) {
    %c0_i32 = arith.constant 0 : i32
    %c0_i32_0 = arith.constant 0 : i32
    %c0_i32_1 = arith.constant 0 : i32
    return %c0_i32, %c0_i32_0 : i32, i32
  }
  func.func @transform_9(%arg0: i32) -> (i32, i32) {
    %c0_i32 = arith.constant 0 : i32
    %c0_i32_0 = arith.constant 0 : i32
    %c0_i32_1 = arith.constant 0 : i32
    return %c0_i32, %c0_i32_0 : i32, i32
  }
  func.func @transform_10(%arg0: i32) -> (i32, i32) {
    %c0_i32 = arith.constant 0 : i32
    %c0_i32_0 = arith.constant 0 : i32
    %c0_i32_1 = arith.constant 0 : i32
    return %c0_i32, %c0_i32_0 : i32, i32
  }
  func.func @transform_11(%arg0: i32) -> (i32, i32) {
    %c0_i32 = arith.constant 0 : i32
    %c0_i32_0 = arith.constant 0 : i32
    %c0_i32_1 = arith.constant 0 : i32
    return %c0_i32, %c0_i32_0 : i32, i32
  }
  func.func @transform_12(%arg0: i32) -> (i32, i32) {
    %c0_i32 = arith.constant 0 : i32
    %c0_i32_0 = arith.constant 0 : i32
    %c0_i32_1 = arith.constant 0 : i32
    return %c0_i32, %c0_i32_0 : i32, i32
  }
  func.func @transform_13(%arg0: i32) -> (i32, i32) {
    %c0_i32 = arith.constant 0 : i32
    %c0_i32_0 = arith.constant 0 : i32
    %c0_i32_1 = arith.constant 0 : i32
    return %c0_i32, %c0_i32_0 : i32, i32
  }
  func.func @transform_14(%arg0: i32) -> (i32, i32) {
    %c0_i32 = arith.constant 0 : i32
    %c0_i32_0 = arith.constant 0 : i32
    %c0_i32_1 = arith.constant 0 : i32
    return %c0_i32, %c0_i32_0 : i32, i32
  }
  func.func @transform_15(%arg0: i32) -> (i32, i32) {
    %c0_i32 = arith.constant 0 : i32
    %c0_i32_0 = arith.constant 0 : i32
    return %arg0, %c0_i32 : i32, i32
  }
}

</mosaic_0001>

<llo_original>
// kernel: tpu_custom_call.1
$region0: #{tpu_custom_call.1}
  #allocation0 [shape = 'u32[]', space=smem, size = 0x4, offset = 0x4, fixed_abs, tag = 'smem constant byte address 0x4 - core index']
  #allocation1 [shape = 'u32[144,128]{1,0:T(1,128)}', space=vmem, size = 0x12000, scoped, tag = 'internal scratch']
  %s0 = inlined_call_operand.vmem [shape: bf16[512,32], index: 0, kind: input, shape index: {}]
  %s1 = inlined_call_operand.vmem [shape: bf16[32,64], index: 1, kind: input, shape index: {}]
  %s2 = inlined_call_operand.vmem [shape: f32[1,64], index: 2, kind: input, shape index: {}]
  %s3 = inlined_call_operand.vmem [shape: bf16[64,64], index: 3, kind: input, shape index: {}]
  %s4 = inlined_call_operand.vmem [shape: f32[1,64], index: 4, kind: input, shape index: {}]
  %s5 = inlined_call_operand.vmem [shape: bf16[64,48], index: 5, kind: input, shape index: {}]
  %s6 = inlined_call_operand.vmem [shape: f32[1,48], index: 6, kind: input, shape index: {}]
  %s7 = inlined_call_operand.vmem [shape: bf16[48,48], index: 7, kind: input, shape index: {}]
  %s8 = inlined_call_operand.vmem [shape: f32[1,48], index: 8, kind: input, shape index: {}]
  %s9 = inlined_call_operand.vmem [shape: bf16[48,32], index: 9, kind: input, shape index: {}]
  %s10 = inlined_call_operand.vmem [shape: f32[1,32], index: 10, kind: input, shape index: {}]
  %s11 = inlined_call_operand.vmem [shape: bf16[32,32], index: 11, kind: input, shape index: {}]
  %s12 = inlined_call_operand.vmem [shape: f32[1,32], index: 12, kind: input, shape index: {}]
  %s13 = inlined_call_operand.vmem [shape: bf16[32,8], index: 13, kind: input, shape index: {}]
  %s14 = inlined_call_operand.vmem [shape: f32[1,8], index: 14, kind: input, shape index: {}]
  %s15 = inlined_call_operand.vmem [shape: f32[512,8], index: 15, kind: output, shape index: {}]
  %s16 = sld [smem:[#allocation0]]
  $region93: #{tpu_custom_call.1} parent=0
    _
  %s18 = ssub.s32 1, %s16
  %s19 = scalar_select 0, %s18, %s16
  loop: start=0, step=1, limit=6
  $region2: #{tpu_custom_call.1} parent=0 // loop_pre_header
    _
  $region3: #{tpu_custom_call.1} parent=0 // loop_header
    %s21 = sphi 0, %s25
    %p22 = scmp.ge.s32.totalorder %s21, 6
    %s31 = sphi 0, %s33
    %s34 = sphi 0, %s31
    %s35 = sphi 0, %s34
    %s51 = sphi 0, %s35
    %s55 = sphi 0, %s55
    %s57 = sphi 0, %s55
    %s58 = sphi 0, %s57
    %s72 = sphi 0, %s58
    %s76 = sphi 0, %s76
    %s78 = sphi 0, %s76
    %s79 = sphi 0, %s78
    %s93 = sphi 0, %s79
    %s97 = sphi 0, %s97
    %s99 = sphi 0, %s97
    %s100 = sphi 0, %s99
    %s114 = sphi 0, %s100
    %s118 = sphi 0, %s118
    %s120 = sphi 0, %s118
    %s121 = sphi 0, %s120
    %s135 = sphi 0, %s121
    %s139 = sphi 0, %s139
    %s141 = sphi 0, %s139
    %s142 = sphi 0, %s141
    %s156 = sphi 0, %s142
    %s160 = sphi 0, %s160
    %s162 = sphi 0, %s160
    %s163 = sphi 0, %s162
    %s177 = sphi 0, %s163
    %s181 = sphi 0, %s181
    %s183 = sphi 0, %s181
    %s184 = sphi 0, %s183
    %s198 = sphi 0, %s184
    %s202 = sphi 0, %s202
    %s204 = sphi 0, %s202
    %s205 = sphi 0, %s204
    %s219 = sphi 0, %s205
    %s223 = sphi 0, %s223
    %s225 = sphi 0, %s223
    %s226 = sphi 0, %s225
    %s240 = sphi 0, %s226
    %s244 = sphi 0, %s244
    %s246 = sphi 0, %s244
    %s247 = sphi 0, %s246
    %s261 = sphi 0, %s247
    %s265 = sphi 0, %s265
    %s267 = sphi 0, %s265
    %s268 = sphi 0, %s267
    %s282 = sphi 0, %s268
    %s286 = sphi 0, %s286
    %s288 = sphi 0, %s286
    %s289 = sphi 0, %s288
    %s303 = sphi 0, %s289
    %s307 = sphi 0, %s307
    %s309 = sphi 0, %s307
    %s310 = sphi 0, %s309
    %s324 = sphi 0, %s310
    %s328 = sphi 0, %s328
    %s330 = sphi 0, %s328
    %s331 = sphi 0, %s330
    %s345 = sphi 0, %s331
    %s351 = sphi 0, %s353
    %s354 = sphi 0, %s351
    %s355 = sphi 0, %s354
    %s371 = sphi 0, %s355
  $region4: #{tpu_custom_call.1} parent=0 // loop_header_branch
    %24 = sbr.rel (%p22) target = $region8
  $region5: #{tpu_custom_call.1} parent=0 // loop_body
    %s26 = ssub.s32 %s21, 1
    %s27 = ssub.s32 %s21, 2
    %s28 = sadd.s32 %s21, 1
    %s29 = ssub.s32 %s21, %s28
    %p30 = scmp.eq.s32.totalorder %s29, 0
    %s32 = sadd.s32 %s31, 1
    %s33 = scalar_select %p30, %s31, %s32
    %p36 = pneg %p30
    %p37 = scmp.eq.s32.totalorder %s21, 3
    %p38 = por %p36, %p37
    %p39 = scmp.ne.s32.totalorder %s31, %s34
    %p40 = scmp.eq.s32.totalorder %s21, 0
    %p41 = por %p39, %p40
    %p42 = scmp.ne.s32.totalorder %s31, %s34
    %p43 = scmp.eq.s32.totalorder %s26, 3
    %p44 = por %p42, %p43
    %p45 = scmp.ne.s32.totalorder %s34, %s35
    %p46 = scmp.eq.s32.totalorder %s26, 0
    %p47 = por %p45, %p46
    %p48 = scmp.ne.s32.totalorder %s34, %s35
    %p49 = scmp.eq.s32.totalorder %s27, 3
    %p50 = por %p48, %p49
    %p52 = scmp.ne.s32.totalorder %s35, %s51
    %p53 = scmp.eq.s32.totalorder %s27, 0
    %p54 = por %p52, %p53
    %s56 = sadd.s32 %s55, 1
    %p59 = scmp.eq.s32.totalorder %s21, 3
    %p60 = scmp.ne.s32.totalorder %s55, %s57
    %p61 = scmp.eq.s32.totalorder %s21, 0
    %p62 = por %p60, %p61
    %p63 = scmp.ne.s32.totalorder %s55, %s57
    %p64 = scmp.eq.s32.totalorder %s26, 3
    %p65 = por %p63, %p64
    %p66 = scmp.ne.s32.totalorder %s57, %s58
    %p67 = scmp.eq.s32.totalorder %s26, 0
    %p68 = por %p66, %p67
    %p69 = scmp.ne.s32.totalorder %s57, %s58
    %p70 = scmp.eq.s32.totalorder %s27, 3
    %p71 = por %p69, %p70
    %p73 = scmp.ne.s32.totalorder %s58, %s72
    %p74 = scmp.eq.s32.totalorder %s27, 0
    %p75 = por %p73, %p74
    %s77 = sadd.s32 %s76, 1
    %p80 = scmp.eq.s32.totalorder %s21, 3
    %p81 = scmp.ne.s32.totalorder %s76, %s78
    %p82 = scmp.eq.s32.totalorder %s21, 0
    %p83 = por %p81, %p82
    %p84 = scmp.ne.s32.totalorder %s76, %s78
    %p85 = scmp.eq.s32.totalorder %s26, 3
    %p86 = por %p84, %p85
    %p87 = scmp.ne.s32.totalorder %s78, %s79
    %p88 = scmp.eq.s32.totalorder %s26, 0
    %p89 = por %p87, %p88
    %p90 = scmp.ne.s32.totalorder %s78, %s79
    %p91 = scmp.eq.s32.totalorder %s27, 3
    %p92 = por %p90, %p91
    %p94 = scmp.ne.s32.totalorder %s79, %s93
    %p95 = scmp.eq.s32.totalorder %s27, 0
    %p96 = por %p94, %p95
    %s98 = sadd.s32 %s97, 1
    %p101 = scmp.eq.s32.totalorder %s21, 3
    %p102 = scmp.ne.s32.totalorder %s97, %s99
    %p103 = scmp.eq.s32.totalorder %s21, 0
    %p104 = por %p102, %p103
    %p105 = scmp.ne.s32.totalorder %s97, %s99
    %p106 = scmp.eq.s32.totalorder %s26, 3
    %p107 = por %p105, %p106
    %p108 = scmp.ne.s32.totalorder %s99, %s100
    %p109 = scmp.eq.s32.totalorder %s26, 0
    %p110 = por %p108, %p109
    %p111 = scmp.ne.s32.totalorder %s99, %s100
    %p112 = scmp.eq.s32.totalorder %s27, 3
    %p113 = por %p111, %p112
    %p115 = scmp.ne.s32.totalorder %s100, %s114
    %p116 = scmp.eq.s32.totalorder %s27, 0
    %p117 = por %p115, %p116
    %s119 = sadd.s32 %s118, 1
    %p122 = scmp.eq.s32.totalorder %s21, 3
    %p123 = scmp.ne.s32.totalorder %s118, %s120
    %p124 = scmp.eq.s32.totalorder %s21, 0
    %p125 = por %p123, %p124
    %p126 = scmp.ne.s32.totalorder %s118, %s120
    %p127 = scmp.eq.s32.totalorder %s26, 3
    %p128 = por %p126, %p127
    %p129 = scmp.ne.s32.totalorder %s120, %s121
    %p130 = scmp.eq.s32.totalorder %s26, 0
    %p131 = por %p129, %p130
    %p132 = scmp.ne.s32.totalorder %s120, %s121
    %p133 = scmp.eq.s32.totalorder %s27, 3
    %p134 = por %p132, %p133
    %p136 = scmp.ne.s32.totalorder %s121, %s135
    %p137 = scmp.eq.s32.totalorder %s27, 0
    %p138 = por %p136, %p137
    %s140 = sadd.s32 %s139, 1
    %p143 = scmp.eq.s32.totalorder %s21, 3
    %p144 = scmp.ne.s32.totalorder %s139, %s141
    %p145 = scmp.eq.s32.totalorder %s21, 0
    %p146 = por %p144, %p145
    %p147 = scmp.ne.s32.totalorder %s139, %s141
    %p148 = scmp.eq.s32.totalorder %s26, 3
    %p149 = por %p147, %p148
    %p150 = scmp.ne.s32.totalorder %s141, %s142
    %p151 = scmp.eq.s32.totalorder %s26, 0
    %p152 = por %p150, %p151
    %p153 = scmp.ne.s32.totalorder %s141, %s142
    %p154 = scmp.eq.s32.totalorder %s27, 3
    %p155 = por %p153, %p154
    %p157 = scmp.ne.s32.totalorder %s142, %s156
    %p158 = scmp.eq.s32.totalorder %s27, 0
    %p159 = por %p157, %p158
    %s161 = sadd.s32 %s160, 1
    %p164 = scmp.eq.s32.totalorder %s21, 3
    %p165 = scmp.ne.s32.totalorder %s160, %s162
    %p166 = scmp.eq.s32.totalorder %s21, 0
    %p167 = por %p165, %p166
    %p168 = scmp.ne.s32.totalorder %s160, %s162
    %p169 = scmp.eq.s32.totalorder %s26, 3
    %p170 = por %p168, %p169
    %p171 = scmp.ne.s32.totalorder %s162, %s163
    %p172 = scmp.eq.s32.totalorder %s26, 0
    %p173 = por %p171, %p172
    %p174 = scmp.ne.s32.totalorder %s162, %s163
    %p175 = scmp.eq.s32.totalorder %s27, 3
    %p176 = por %p174, %p175
    %p178 = scmp.ne.s32.totalorder %s163, %s177
    %p179 = scmp.eq.s32.totalorder %s27, 0
    %p180 = por %p178, %p179
    %s182 = sadd.s32 %s181, 1
    %p185 = scmp.eq.s32.totalorder %s21, 3
    %p186 = scmp.ne.s32.totalorder %s181, %s183
    %p187 = scmp.eq.s32.totalorder %s21, 0
    %p188 = por %p186, %p187
    %p189 = scmp.ne.s32.totalorder %s181, %s183
    %p190 = scmp.eq.s32.totalorder %s26, 3
    %p191 = por %p189, %p190
    %p192 = scmp.ne.s32.totalorder %s183, %s184
    %p193 = scmp.eq.s32.totalorder %s26, 0
    %p194 = por %p192, %p193
    %p195 = scmp.ne.s32.totalorder %s183, %s184
    %p196 = scmp.eq.s32.totalorder %s27, 3
    %p197 = por %p195, %p196
    %p199 = scmp.ne.s32.totalorder %s184, %s198
    %p200 = scmp.eq.s32.totalorder %s27, 0
    %p201 = por %p199, %p200
    %s203 = sadd.s32 %s202, 1
    %p206 = scmp.eq.s32.totalorder %s21, 3
    %p207 = scmp.ne.s32.totalorder %s202, %s204
    %p208 = scmp.eq.s32.totalorder %s21, 0
    %p209 = por %p207, %p208
    %p210 = scmp.ne.s32.totalorder %s202, %s204
    %p211 = scmp.eq.s32.totalorder %s26, 3
    %p212 = por %p210, %p211
    %p213 = scmp.ne.s32.totalorder %s204, %s205
    %p214 = scmp.eq.s32.totalorder %s26, 0
    %p215 = por %p213, %p214
    %p216 = scmp.ne.s32.totalorder %s204, %s205
    %p217 = scmp.eq.s32.totalorder %s27, 3
    %p218 = por %p216, %p217
    %p220 = scmp.ne.s32.totalorder %s205, %s219
    %p221 = scmp.eq.s32.totalorder %s27, 0
    %p222 = por %p220, %p221
    %s224 = sadd.s32 %s223, 1
    %p227 = scmp.eq.s32.totalorder %s21, 3
    %p228 = scmp.ne.s32.totalorder %s223, %s225
    %p229 = scmp.eq.s32.totalorder %s21, 0
    %p230 = por %p228, %p229
    %p231 = scmp.ne.s32.totalorder %s223, %s225
    %p232 = scmp.eq.s32.totalorder %s26, 3
    %p233 = por %p231, %p232
    %p234 = scmp.ne.s32.totalorder %s225, %s226
    %p235 = scmp.eq.s32.totalorder %s26, 0
    %p236 = por %p234, %p235
    %p237 = scmp.ne.s32.totalorder %s225, %s226
    %p238 = scmp.eq.s32.totalorder %s27, 3
    %p239 = por %p237, %p238
    %p241 = scmp.ne.s32.totalorder %s226, %s240
    %p242 = scmp.eq.s32.totalorder %s27, 0
    %p243 = por %p241, %p242
    %s245 = sadd.s32 %s244, 1
    %p248 = scmp.eq.s32.totalorder %s21, 3
    %p249 = scmp.ne.s32.totalorder %s244, %s246
    %p250 = scmp.eq.s32.totalorder %s21, 0
    %p251 = por %p249, %p250
    %p252 = scmp.ne.s32.totalorder %s244, %s246
    %p253 = scmp.eq.s32.totalorder %s26, 3
    %p254 = por %p252, %p253
    %p255 = scmp.ne.s32.totalorder %s246, %s247
    %p256 = scmp.eq.s32.totalorder %s26, 0
    %p257 = por %p255, %p256
    %p258 = scmp.ne.s32.totalorder %s246, %s247
    %p259 = scmp.eq.s32.totalorder %s27, 3
    %p260 = por %p258, %p259
    %p262 = scmp.ne.s32.totalorder %s247, %s261
    %p263 = scmp.eq.s32.totalorder %s27, 0
    %p264 = por %p262, %p263
    %s266 = sadd.s32 %s265, 1
    %p269 = scmp.eq.s32.totalorder %s21, 3
    %p270 = scmp.ne.s32.totalorder %s265, %s267
    %p271 = scmp.eq.s32.totalorder %s21, 0
    %p272 = por %p270, %p271
    %p273 = scmp.ne.s32.totalorder %s265, %s267
    %p274 = scmp.eq.s32.totalorder %s26, 3
    %p275 = por %p273, %p274
    %p276 = scmp.ne.s32.totalorder %s267, %s268
    %p277 = scmp.eq.s32.totalorder %s26, 0
    %p278 = por %p276, %p277
    %p279 = scmp.ne.s32.totalorder %s267, %s268
    %p280 = scmp.eq.s32.totalorder %s27, 3
    %p281 = por %p279, %p280
    %p283 = scmp.ne.s32.totalorder %s268, %s282
    %p284 = scmp.eq.s32.totalorder %s27, 0
    %p285 = por %p283, %p284
    %s287 = sadd.s32 %s286, 1
    %p290 = scmp.eq.s32.totalorder %s21, 3
    %p291 = scmp.ne.s32.totalorder %s286, %s288
    %p292 = scmp.eq.s32.totalorder %s21, 0
    %p293 = por %p291, %p292
    %p294 = scmp.ne.s32.totalorder %s286, %s288
    %p295 = scmp.eq.s32.totalorder %s26, 3
    %p296 = por %p294, %p295
    %p297 = scmp.ne.s32.totalorder %s288, %s289
    %p298 = scmp.eq.s32.totalorder %s26, 0
    %p299 = por %p297, %p298
    %p300 = scmp.ne.s32.totalorder %s288, %s289
    %p301 = scmp.eq.s32.totalorder %s27, 3
    %p302 = por %p300, %p301
    %p304 = scmp.ne.s32.totalorder %s289, %s303
    %p305 = scmp.eq.s32.totalorder %s27, 0
    %p306 = por %p304, %p305
    %s308 = sadd.s32 %s307, 1
    %p311 = scmp.eq.s32.totalorder %s21, 3
    %p312 = scmp.ne.s32.totalorder %s307, %s309
    %p313 = scmp.eq.s32.totalorder %s21, 0
    %p314 = por %p312, %p313
    %p315 = scmp.ne.s32.totalorder %s307, %s309
    %p316 = scmp.eq.s32.totalorder %s26, 3
    %p317 = por %p315, %p316
    %p318 = scmp.ne.s32.totalorder %s309, %s310
    %p319 = scmp.eq.s32.totalorder %s26, 0
    %p320 = por %p318, %p319
    %p321 = scmp.ne.s32.totalorder %s309, %s310
    %p322 = scmp.eq.s32.totalorder %s27, 3
    %p323 = por %p321, %p322
    %p325 = scmp.ne.s32.totalorder %s310, %s324
    %p326 = scmp.eq.s32.totalorder %s27, 0
    %p327 = por %p325, %p326
    %s329 = sadd.s32 %s328, 1
    %p332 = scmp.eq.s32.totalorder %s21, 3
    %p333 = scmp.ne.s32.totalorder %s328, %s330
    %p334 = scmp.eq.s32.totalorder %s21, 0
    %p335 = por %p333, %p334
    %p336 = scmp.ne.s32.totalorder %s328, %s330
    %p337 = scmp.eq.s32.totalorder %s26, 3
    %p338 = por %p336, %p337
    %p339 = scmp.ne.s32.totalorder %s330, %s331
    %p340 = scmp.eq.s32.totalorder %s26, 0
    %p341 = por %p339, %p340
    %p342 = scmp.ne.s32.totalorder %s330, %s331
    %p343 = scmp.eq.s32.totalorder %s27, 3
    %p344 = por %p342, %p343
    %p346 = scmp.ne.s32.totalorder %s331, %s345
    %p347 = scmp.eq.s32.totalorder %s27, 0
    %p348 = por %p346, %p347
    %s349 = ssub.s32 %s21, %s28
    %p350 = scmp.eq.s32.totalorder %s349, 0
    %s352 = sadd.s32 %s351, 1
    %s353 = scalar_select %p350, %s351, %s352
    %p356 = pneg %p350
    %p357 = scmp.eq.s32.totalorder %s21, 3
    %p358 = por %p356, %p357
    %p359 = scmp.ne.s32.totalorder %s351, %s354
    %p360 = scmp.eq.s32.totalorder %s21, 0
    %p361 = por %p359, %p360
    %p362 = scmp.ne.s32.totalorder %s351, %s354
    %p363 = scmp.eq.s32.totalorder %s26, 3
    %p364 = por %p362, %p363
    %p365 = scmp.ne.s32.totalorder %s354, %s355
    %p366 = scmp.eq.s32.totalorder %s26, 0
    %p367 = por %p365, %p366
    %p368 = scmp.ne.s32.totalorder %s354, %s355
    %p369 = scmp.eq.s32.totalorder %s27, 3
    %p370 = por %p368, %p369
    %p372 = scmp.ne.s32.totalorder %s355, %s371
    %p373 = scmp.eq.s32.totalorder %s27, 0
    %p374 = por %p372, %p373
    %p375 = scmp.le.s32.totalorder 1, %s21
    %p376 = scmp.lt.s32.totalorder %s21, 5
    %p377 = pnand %p375, %p376
    %p378 = pneg %p377
    // Predicated region
    $region9: #{tpu_custom_call.1} parent=5 // pred_check
      _
    $region10: #{tpu_custom_call.1} parent=5 // pred_check_branch
      %380 = sbr.rel (%p377) target = $region12
    $region11: #{tpu_custom_call.1} parent=5 // pred_region
      %s381 = ssub.s32 %s21, 1
      // Predicated region
      $region13: #{tpu_custom_call.1} parent=11 // pred_check
        %p382 = pneg %p68
      $region14: #{tpu_custom_call.1} parent=11 // pred_check_branch
        %384 = sbr.rel (%p382) target = $region16
      $region15: #{tpu_custom_call.1} parent=11 // pred_region
        _
      $region16: #{tpu_custom_call.1} parent=11 // pred_fallthru
        _
      // Predicated region
      $region17: #{tpu_custom_call.1} parent=11 // pred_check
        %p385 = pneg %p89
      $region18: #{tpu_custom_call.1} parent=11 // pred_check_branch
        %387 = sbr.rel (%p385) target = $region20
      $region19: #{tpu_custom_call.1} parent=11 // pred_region
        _
      $region20: #{tpu_custom_call.1} parent=11 // pred_fallthru
        _
      // Predicated region
      $region21: #{tpu_custom_call.1} parent=11 // pred_check
        %p388 = pneg %p110
      $region22: #{tpu_custom_call.1} parent=11 // pred_check_branch
        %390 = sbr.rel (%p388) target = $region24
      $region23: #{tpu_custom_call.1} parent=11 // pred_region
        _
      $region24: #{tpu_custom_call.1} parent=11 // pred_fallthru
        _
      // Predicated region
      $region25: #{tpu_custom_call.1} parent=11 // pred_check
        %p391 = pneg %p131
      $region26: #{tpu_custom_call.1} parent=11 // pred_check_branch
        %393 = sbr.rel (%p391) target = $region28
      $region27: #{tpu_custom_call.1} parent=11 // pred_region
        _
      $region28: #{tpu_custom_call.1} parent=11 // pred_fallthru
        _
      // Predicated region
      $region29: #{tpu_custom_call.1} parent=11 // pred_check
        %p394 = pneg %p152
      $region30: #{tpu_custom_call.1} parent=11 // pred_check_branch
        %396 = sbr.rel (%p394) target = $region32
      $region31: #{tpu_custom_call.1} parent=11 // pred_region
        _
      $region32: #{tpu_custom_call.1} parent=11 // pred_fallthru
        _
      // Predicated region
      $region33: #{tpu_custom_call.1} parent=11 // pred_check
        %p397 = pneg %p173
      $region34: #{tpu_custom_call.1} parent=11 // pred_check_branch
        %399 = sbr.rel (%p397) target = $region36
      $region35: #{tpu_custom_call.1} parent=11 // pred_region
        _
      $region36: #{tpu_custom_call.1} parent=11 // pred_fallthru
        _
      // Predicated region
      $region37: #{tpu_custom_call.1} parent=11 // pred_check
        %p400 = pneg %p194
      $region38: #{tpu_custom_call.1} parent=11 // pred_check_branch
        %402 = sbr.rel (%p400) target = $region40
      $region39: #{tpu_custom_call.1} parent=11 // pred_region
        _
      $region40: #{tpu_custom_call.1} parent=11 // pred_fallthru
        _
      // Predicated region
      $region41: #{tpu_custom_call.1} parent=11 // pred_check
        %p403 = pneg %p215
      $region42: #{tpu_custom_call.1} parent=11 // pred_check_branch
        %405 = sbr.rel (%p403) target = $region44
      $region43: #{tpu_custom_call.1} parent=11 // pred_region
        _
      $region44: #{tpu_custom_call.1} parent=11 // pred_fallthru
        _
      // Predicated region
      $region45: #{tpu_custom_call.1} parent=11 // pred_check
        %p406 = pneg %p236
      $region46: #{tpu_custom_call.1} parent=11 // pred_check_branch
        %408 = sbr.rel (%p406) target = $region48
      $region47: #{tpu_custom_call.1} parent=11 // pred_region
        _
      $region48: #{tpu_custom_call.1} parent=11 // pred_fallthru
        _
      // Predicated region
      $region49: #{tpu_custom_call.1} parent=11 // pred_check
        %p409 = pneg %p257
      $region50: #{tpu_custom_call.1} parent=11 // pred_check_branch
        %411 = sbr.rel (%p409) target = $region52
      $region51: #{tpu_custom_call.1} parent=11 // pred_region
        _
      $region52: #{tpu_custom_call.1} parent=11 // pred_fallthru
        _
      // Predicated region
      $region53: #{tpu_custom_call.1} parent=11 // pred_check
        %p412 = pneg %p278
      $region54: #{tpu_custom_call.1} parent=11 // pred_check_branch
        %414 = sbr.rel (%p412) target = $region56
      $region55: #{tpu_custom_call.1} parent=11 // pred_region
        _
      $region56: #{tpu_custom_call.1} parent=11 // pred_fallthru
        _
      // Predicated region
      $region57: #{tpu_custom_call.1} parent=11 // pred_check
        %p415 = pneg %p299
      $region58: #{tpu_custom_call.1} parent=11 // pred_check_branch
        %417 = sbr.rel (%p415) target = $region60
      $region59: #{tpu_custom_call.1} parent=11 // pred_region
        _
      $region60: #{tpu_custom_call.1} parent=11 // pred_fallthru
        _
      // Predicated region
      $region61: #{tpu_custom_call.1} parent=11 // pred_check
        %p418 = pneg %p320
      $region62: #{tpu_custom_call.1} parent=11 // pred_check_branch
        %420 = sbr.rel (%p418) target = $region64
      $region63: #{tpu_custom_call.1} parent=11 // pred_region
        _
      $region64: #{tpu_custom_call.1} parent=11 // pred_fallthru
        _
      // Predicated region
      $region65: #{tpu_custom_call.1} parent=11 // pred_check
        %p421 = pneg %p341
      $region66: #{tpu_custom_call.1} parent=11 // pred_check_branch
        %423 = sbr.rel (%p421) target = $region68
      $region67: #{tpu_custom_call.1} parent=11 // pred_region
        _
      $region68: #{tpu_custom_call.1} parent=11 // pred_fallthru
        _
    $region12: #{tpu_custom_call.1} parent=5 // pred_fallthru
      _
    %p424 = scmp.lt.s32.totalorder %s21, 4
    // Predicated region
    $region69: #{tpu_custom_call.1} parent=5 // pred_check
      %p425 = pneg %p424
    $region70: #{tpu_custom_call.1} parent=5 // pred_check_branch
      %427 = sbr.rel (%p425) target = $region72
    $region71: #{tpu_custom_call.1} parent=5 // pred_region
      // Predicated region
      $region73: #{tpu_custom_call.1} parent=71 // pred_check
        %p428 = pneg %p41
      $region74: #{tpu_custom_call.1} parent=71 // pred_check_branch
        %430 = sbr.rel (%p428) target = $region76
      $region75: #{tpu_custom_call.1} parent=71 // pred_region
        %s431 = smul.u32 16, %s21
        %p432 = scmp.lt.s32.totalorder %s431, 63
        %s433 = scalar_select %p432, %s431, 63
        %s434 = smul.addr %s433, 4
        %s435 = scalar_lea.vmem %s0, %s434
        %s436 = smul.u32 16, %s21
      $region76: #{tpu_custom_call.1} parent=71 // pred_fallthru
        _
    $region72: #{tpu_custom_call.1} parent=5 // pred_fallthru
      _
    %p437 = scmp.le.s32.totalorder 1, %s21
    %p438 = scmp.lt.s32.totalorder %s21, 5
    %p439 = pnand %p437, %p438
    %p440 = pneg %p439
    // Predicated region
    $region77: #{tpu_custom_call.1} parent=5 // pred_check
      _
    $region78: #{tpu_custom_call.1} parent=5 // pred_check_branch
      %442 = sbr.rel (%p439) target = $region80
    $region79: #{tpu_custom_call.1} parent=5 // pred_region
      %s443 = ssub.s32 %s21, 1
      %s444 = smul.u32 16, %s26
      %p445 = scmp.lt.s32.totalorder %s444, 63
      %s446 = scalar_select %p445, %s444, 63
      %s447 = smul.addr %s446, 4
      %s448 = scalar_lea.vmem %s0, %s447
      %p449 = pneg %p47
      %p450 = pneg %p44
      %p451 = pneg %p68
      %p452 = pneg %p65
      %p453 = pneg %p89
      %p454 = pneg %p86
      %p455 = pneg %p110
      %p456 = pneg %p107
      %p457 = pneg %p131
      %p458 = pneg %p128
      %p459 = pneg %p152
      %p460 = pneg %p149
      %p461 = pneg %p173
      %p462 = pneg %p170
      %p463 = pneg %p194
      %p464 = pneg %p191
      %p465 = pneg %p215
      %p466 = pneg %p212
      %p467 = pneg %p236
      %p468 = pneg %p233
      %p469 = pneg %p257
      %p470 = pneg %p254
      %p471 = pneg %p278
      %p472 = pneg %p275
      %p473 = pneg %p299
      %p474 = pneg %p296
      %p475 = pneg %p320
      %p476 = pneg %p317
      %p477 = pneg %p341
      %p478 = pneg %p338
      %p479 = pneg %p367
      %p480 = pneg %p364
      %s481 = smul.u32 16, %s26
      %p482 = scmp.lt.s32.totalorder %s481, 63
      %s483 = scalar_select %p482, %s481, 63
      %s484 = smul.addr %s483, 8
      %s485 = scalar_lea.vmem %s15, %s484
      %s486 = smul.u32 16, %s26
      %p487 = scmp.lt.s32.totalorder %s486, 63
      %s488 = scalar_select %p487, %s486, 63
      %s489 = smul.addr %s488, 4
      %s490 = scalar_lea.vmem %s0, %s489
      %s491 = smul.u32 16, %s26
      %s492 = smul.u32 16, %s26
      %p493 = scmp.lt.s32.totalorder %s492, 63
      %s494 = scalar_select %p493, %s492, 63
      %s495 = smul.addr %s494, 8
      %s496 = scalar_lea.vmem %s15, %s495
      %s497 = smul.u32 16, %s26
      %v499 = vld [vmem:[%s490] sm:$0xf]
      %v500 = vld [vmem:[%s490 + $0x4] sm:$0xf]
      %v501 = vld [vmem:[%s490 + $0x8] sm:$0xf]
      %v502 = vld [vmem:[%s490 + $0xc] sm:$0xf]
      %v503 = vld [vmem:[%s490 + $0x10] sm:$0xf]
      %v504 = vld [vmem:[%s490 + $0x14] sm:$0xf]
      %v505 = vld [vmem:[%s490 + $0x18] sm:$0xf]
      %v506 = vld [vmem:[%s490 + $0x1c] sm:$0xf]
      %v507 = vld [vmem:[%s490 + $0x20] sm:$0xf]
      %v508 = vld [vmem:[%s490 + $0x24] sm:$0xf]
      %v509 = vld [vmem:[%s490 + $0x28] sm:$0xf]
      %v510 = vld [vmem:[%s490 + $0x2c] sm:$0xf]
      %v511 = vld [vmem:[%s490 + $0x30] sm:$0xf]
      %v512 = vld [vmem:[%s490 + $0x34] sm:$0xf]
      %v513 = vld [vmem:[%s490 + $0x38] sm:$0xf]
      %v514 = vld [vmem:[%s490 + $0x3c] sm:$0xf]
      %v515 = vld [vmem:[%s1] sm:$0xf]
      %v516 = vld [vmem:[%s1 + $0x4] sm:$0xf]
      %v517 = vld [vmem:[%s1 + $0x8] sm:$0xf]
      %v518 = vld [vmem:[%s1 + $0xc] sm:$0xf]
      %v519 = vld [vmem:[%s2] sm:$0x1]
      %v521 = vlaneseq
      %v522 = vshrl.u32 %v521, 7
      %v523 = vsub.s32 0, %v522
      %v524 = vrot.slane %v519, %v523
      %v542 = vunpack.c.l.b16 %v499
      %v543 = vunpack.c.l.b16 %v500
      %v544 = vunpack.c.l.b16 %v501
      %v545 = vunpack.c.l.b16 %v502
      %v546 = vunpack.c.l.b16 %v503
      %v547 = vunpack.c.l.b16 %v504
      %v548 = vunpack.c.l.b16 %v505
      %v549 = vunpack.c.l.b16 %v506
      %v550 = vunpack.c.l.b16 %v507
      %v551 = vunpack.c.l.b16 %v508
      %v552 = vunpack.c.l.b16 %v509
      %v553 = vunpack.c.l.b16 %v510
      %v554 = vunpack.c.l.b16 %v511
      %v555 = vunpack.c.l.b16 %v512
      %v556 = vunpack.c.l.b16 %v513
      %v557 = vunpack.c.l.b16 %v514
      %v558 = vpack.c.b16 %v543, %v542
      %v559 = vpack.c.b16 %v545, %v544
      %v560 = vpack.c.b16 %v547, %v546
      %v561 = vpack.c.b16 %v549, %v548
      %v562 = vpack.c.b16 %v551, %v550
      %v563 = vpack.c.b16 %v553, %v552
      %v564 = vpack.c.b16 %v555, %v554
      %v565 = vpack.c.b16 %v557, %v556
      %v570 = vunpack.c.l.b16 %v515
      %v571 = vunpack.c.l.b16 %v516
      %v572 = vunpack.c.l.b16 %v517
      %v573 = vunpack.c.l.b16 %v518
      %v574 = vpack.c.b16 %v571, %v570
      %v575 = vpack.c.b16 %v573, %v572
      %vm578 = vcmask 261120
      %v580 = vsel %vm578, %v558, 0
      %v583 = vsel %vm578, %v559, 0
      %v586 = vsel %vm578, %v560, 0
      %v589 = vsel %vm578, %v561, 0
      %v592 = vsel %vm578, %v562, 0
      %v595 = vsel %vm578, %v563, 0
      %v598 = vsel %vm578, %v564, 0
      %v601 = vsel %vm578, %v565, 0
      %603 = vmatprep.subr.bf16.mxu0 0
      %604 = vmatpush1.bf16.msra.mxu0 0
      %605 = vmatprep.subr.bf16.mxu0 0
      %606 = vmatpush1.bf16.msra.mxu0 0
      %607 = vmatprep.subr.bf16.mxu0 0
      %608 = vmatpush1.bf16.msra.mxu0 0
      %609 = vmatprep.subr.bf16.mxu0 0
      %610 = vmatpush1.bf16.msra.mxu0 0
      %611 = vmatprep.subr.bf16.mxu0 0
      %612 = vmatpush1.bf16.msra.mxu0 0
      %613 = vmatprep.subr.bf16.mxu0 0
      %614 = vmatpush1.bf16.msra.mxu0 0
      %615 = vmatprep.subr.bf16.mxu0 0
      %616 = vmatpush1.bf16.msra.mxu0 %v575
      %617 = vmatprep.subr.bf16.mxu0 0
      %618 = vmatpush1.bf16.msra.mxu0 %v574
      %619 = vmatprep.subr.bf16.mxu0 0
      %620 = vmatpush2.bf16.msra.mxu0 0
      %621 = vmatprep.subr.bf16.mxu0 0
      %622 = vmatpush2.bf16.msra.mxu0 0
      %623 = vmatprep.subr.bf16.mxu0 0
      %624 = vmatpush2.bf16.msra.mxu0 0
      %625 = vmatprep.subr.bf16.mxu0 0
      %626 = vmatpush2.bf16.msra.mxu0 0
      %627 = vmatprep.subr.bf16.mxu0 0
      %628 = vmatpush2.bf16.msra.mxu0 0
      %629 = vmatprep.subr.bf16.mxu0 0
      %630 = vmatpush2.bf16.msra.mxu0 0
      %631 = vmatprep.subr.bf16.mxu0 0
      %632 = vmatpush2.bf16.msra.mxu0 0
      %633 = vmatprep.subr.bf16.mxu0 0
      %634 = vmatpush2.bf16.msra.mxu0 0
      %635 = vmatprep.mubr.bf16.mxu0 0
      %636 = vmatmul.mubr.bf16.gmra.mxu0 %v580
      %v637 = vpop.f32.mrf.mxu0
      %v638 = vadd.f32 %v524, %v637
      %v639 = vpop.f32.mrf.mxu0
      %v640 = vpop.f32.mrf.mxu0
      %v641 = vadd.f32 %v524, %v640
      %v642 = vpop.f32.mrf.mxu0
      %643 = vmatprep.mubr.bf16.mxu0 0
      %644 = vmatmul.mubr.bf16.gmra.mxu0 %v583
      %v645 = vpop.f32.mrf.mxu0
      %v646 = vadd.f32 %v524, %v645
      %v647 = vpop.f32.mrf.mxu0
      %v648 = vpop.f32.mrf.mxu0
      %v649 = vadd.f32 %v524, %v648
      %v650 = vpop.f32.mrf.mxu0
      %651 = vmatprep.mubr.bf16.mxu0 0
      %652 = vmatmul.mubr.bf16.gmra.mxu0 %v586
      %v653 = vpop.f32.mrf.mxu0
      %v654 = vadd.f32 %v524, %v653
      %v655 = vpop.f32.mrf.mxu0
      %v656 = vpop.f32.mrf.mxu0
      %v657 = vadd.f32 %v524, %v656
      %v658 = vpop.f32.mrf.mxu0
      %659 = vmatprep.mubr.bf16.mxu0 0
      %660 = vmatmul.mubr.bf16.gmra.mxu0 %v589
      %v661 = vpop.f32.mrf.mxu0
      %v662 = vadd.f32 %v524, %v661
      %v663 = vpop.f32.mrf.mxu0
      %v664 = vpop.f32.mrf.mxu0
      %v665 = vadd.f32 %v524, %v664
      %v666 = vpop.f32.mrf.mxu0
      %667 = vmatprep.mubr.bf16.mxu0 0
      %668 = vmatmul.mubr.bf16.gmra.mxu0 %v592
      %v669 = vpop.f32.mrf.mxu0
      %v670 = vadd.f32 %v524, %v669
      %v671 = vpop.f32.mrf.mxu0
      %v672 = vpop.f32.mrf.mxu0
      %v673 = vadd.f32 %v524, %v672
      %v674 = vpop.f32.mrf.mxu0
      %675 = vmatprep.mubr.bf16.mxu0 0
      %676 = vmatmul.mubr.bf16.gmra.mxu0 %v595
      %v677 = vpop.f32.mrf.mxu0
      %v678 = vadd.f32 %v524, %v677
      %v679 = vpop.f32.mrf.mxu0
      %v680 = vpop.f32.mrf.mxu0
      %v681 = vadd.f32 %v524, %v680
      %v682 = vpop.f32.mrf.mxu0
      %683 = vmatprep.mubr.bf16.mxu0 0
      %684 = vmatmul.mubr.bf16.gmra.mxu0 %v598
      %v685 = vpop.f32.mrf.mxu0
      %v686 = vadd.f32 %v524, %v685
      %v687 = vpop.f32.mrf.mxu0
      %v688 = vpop.f32.mrf.mxu0
      %v689 = vadd.f32 %v524, %v688
      %v690 = vpop.f32.mrf.mxu0
      %691 = vmatprep.mubr.bf16.mxu0 0
      %692 = vmatmul.mubr.bf16.gmra.mxu0 %v601
      %v693 = vpop.f32.mrf.mxu0
      %v694 = vadd.f32 %v524, %v693
      %v695 = vpop.f32.mrf.mxu0
      %v696 = vpop.f32.mrf.mxu0
      %v697 = vadd.f32 %v524, %v696
      %v698 = vpop.f32.mrf.mxu0
      %699 = vdwg.mxu0
      %v700 = vmax.f32 %v638, 0.0
      %v701 = vmax.f32 %v641, 0.0
      %v702 = vmax.f32 %v646, 0.0
      %v703 = vmax.f32 %v649, 0.0
      %v704 = vmax.f32 %v654, 0.0
      %v705 = vmax.f32 %v657, 0.0
      %v706 = vmax.f32 %v662, 0.0
      %v707 = vmax.f32 %v665, 0.0
      %v708 = vmax.f32 %v670, 0.0
      %v709 = vmax.f32 %v673, 0.0
      %v710 = vmax.f32 %v678, 0.0
      %v711 = vmax.f32 %v681, 0.0
      %v712 = vmax.f32 %v686, 0.0
      %v713 = vmax.f32 %v689, 0.0
      %v714 = vmax.f32 %v694, 0.0
      %v715 = vmax.f32 %v697, 0.0
      %v716 = vpack.c.bf16 %v701, %v700
      %v717 = vpack.c.bf16 %v703, %v702
      %v718 = vpack.c.bf16 %v705, %v704
      %v719 = vpack.c.bf16 %v707, %v706
      %v720 = vpack.c.bf16 %v709, %v708
      %v721 = vpack.c.bf16 %v711, %v710
      %v722 = vpack.c.bf16 %v713, %v712
      %v723 = vpack.c.bf16 %v715, %v714
      %v724 = vld [vmem:[%s3] sm:$0xf]
      %v725 = vld [vmem:[%s3 + $0x4] sm:$0xf]
      %v726 = vld [vmem:[%s3 + $0x8] sm:$0xf]
      %v727 = vld [vmem:[%s3 + $0xc] sm:$0xf]
      %v728 = vld [vmem:[%s3 + $0x10] sm:$0xf]
      %v729 = vld [vmem:[%s3 + $0x14] sm:$0xf]
      %v730 = vld [vmem:[%s3 + $0x18] sm:$0xf]
      %v731 = vld [vmem:[%s3 + $0x1c] sm:$0xf]
      %v732 = vld [vmem:[%s4] sm:$0x1]
      %v734 = vlaneseq
      %v735 = vshrl.u32 %v734, 7
      %v736 = vsub.s32 0, %v735
      %v737 = vrot.slane %v732, %v736
      %v747 = vunpack.c.l.b16 %v724
      %v748 = vunpack.c.l.b16 %v725
      %v749 = vunpack.c.l.b16 %v726
      %v750 = vunpack.c.l.b16 %v727
      %v751 = vunpack.c.l.b16 %v728
      %v752 = vunpack.c.l.b16 %v729
      %v753 = vunpack.c.l.b16 %v730
      %v754 = vunpack.c.l.b16 %v731
      %v755 = vpack.c.b16 %v748, %v747
      %v756 = vpack.c.b16 %v750, %v749
      %v757 = vpack.c.b16 %v752, %v751
      %v758 = vpack.c.b16 %v754, %v753
      %vm763 = vcmask 523264
      %v765 = vsel %vm763, %v716, 0
      %v768 = vsel %vm763, %v717, 0
      %v771 = vsel %vm763, %v718, 0
      %v774 = vsel %vm763, %v719, 0
      %v777 = vsel %vm763, %v720, 0
      %v780 = vsel %vm763, %v721, 0
      %v783 = vsel %vm763, %v722, 0
      %v786 = vsel %vm763, %v723, 0
      %788 = vmatprep.subr.bf16.mxu0 0
      %789 = vmatpush1.bf16.msra.mxu0 0
      %790 = vmatprep.subr.bf16.mxu0 0
      %791 = vmatpush1.bf16.msra.mxu0 0
      %792 = vmatprep.subr.bf16.mxu0 0
      %793 = vmatpush1.bf16.msra.mxu0 0
      %794 = vmatprep.subr.bf16.mxu0 0
      %795 = vmatpush1.bf16.msra.mxu0 0
      %796 = vmatprep.subr.bf16.mxu0 0
      %797 = vmatpush1.bf16.msra.mxu0 %v758
      %798 = vmatprep.subr.bf16.mxu0 0
      %799 = vmatpush1.bf16.msra.mxu0 %v757
      %800 = vmatprep.subr.bf16.mxu0 0
      %801 = vmatpush1.bf16.msra.mxu0 %v756
      %802 = vmatprep.subr.bf16.mxu0 0
      %803 = vmatpush1.bf16.msra.mxu0 %v755
      %804 = vmatprep.subr.bf16.mxu0 0
      %805 = vmatpush2.bf16.msra.mxu0 0
      %806 = vmatprep.subr.bf16.mxu0 0
      %807 = vmatpush2.bf16.msra.mxu0 0
      %808 = vmatprep.subr.bf16.mxu0 0
      %809 = vmatpush2.bf16.msra.mxu0 0
      %810 = vmatprep.subr.bf16.mxu0 0
      %811 = vmatpush2.bf16.msra.mxu0 0
      %812 = vmatprep.subr.bf16.mxu0 0
      %813 = vmatpush2.bf16.msra.mxu0 0
      %814 = vmatprep.subr.bf16.mxu0 0
      %815 = vmatpush2.bf16.msra.mxu0 0
      %816 = vmatprep.subr.bf16.mxu0 0
      %817 = vmatpush2.bf16.msra.mxu0 0
      %818 = vmatprep.subr.bf16.mxu0 0
      %819 = vmatpush2.bf16.msra.mxu0 0
      %820 = vmatprep.mubr.bf16.mxu0 0
      %821 = vmatmul.mubr.bf16.gmra.mxu0 %v765
      %v822 = vpop.f32.mrf.mxu0
      %v823 = vadd.f32 %v737, %v822
      %v824 = vpop.f32.mrf.mxu0
      %v825 = vpop.f32.mrf.mxu0
      %v826 = vadd.f32 %v737, %v825
      %v827 = vpop.f32.mrf.mxu0
      %828 = vmatprep.mubr.bf16.mxu0 0
      %829 = vmatmul.mubr.bf16.gmra.mxu0 %v768
      %v830 = vpop.f32.mrf.mxu0
      %v831 = vadd.f32 %v737, %v830
      %v832 = vpop.f32.mrf.mxu0
      %v833 = vpop.f32.mrf.mxu0
      %v834 = vadd.f32 %v737, %v833
      %v835 = vpop.f32.mrf.mxu0
      %836 = vmatprep.mubr.bf16.mxu0 0
      %837 = vmatmul.mubr.bf16.gmra.mxu0 %v771
      %v838 = vpop.f32.mrf.mxu0
      %v839 = vadd.f32 %v737, %v838
      %v840 = vpop.f32.mrf.mxu0
      %v841 = vpop.f32.mrf.mxu0
      %v842 = vadd.f32 %v737, %v841
      %v843 = vpop.f32.mrf.mxu0
      %844 = vmatprep.mubr.bf16.mxu0 0
      %845 = vmatmul.mubr.bf16.gmra.mxu0 %v774
      %v846 = vpop.f32.mrf.mxu0
      %v847 = vadd.f32 %v737, %v846
      %v848 = vpop.f32.mrf.mxu0
      %v849 = vpop.f32.mrf.mxu0
      %v850 = vadd.f32 %v737, %v849
      %v851 = vpop.f32.mrf.mxu0
      %852 = vmatprep.mubr.bf16.mxu0 0
      %853 = vmatmul.mubr.bf16.gmra.mxu0 %v777
      %v854 = vpop.f32.mrf.mxu0
      %v855 = vadd.f32 %v737, %v854
      %v856 = vpop.f32.mrf.mxu0
      %v857 = vpop.f32.mrf.mxu0
      %v858 = vadd.f32 %v737, %v857
      %v859 = vpop.f32.mrf.mxu0
      %860 = vmatprep.mubr.bf16.mxu0 0
      %861 = vmatmul.mubr.bf16.gmra.mxu0 %v780
      %v862 = vpop.f32.mrf.mxu0
      %v863 = vadd.f32 %v737, %v862
      %v864 = vpop.f32.mrf.mxu0
      %v865 = vpop.f32.mrf.mxu0
      %v866 = vadd.f32 %v737, %v865
      %v867 = vpop.f32.mrf.mxu0
      %868 = vmatprep.mubr.bf16.mxu0 0
      %869 = vmatmul.mubr.bf16.gmra.mxu0 %v783
      %v870 = vpop.f32.mrf.mxu0
      %v871 = vadd.f32 %v737, %v870
      %v872 = vpop.f32.mrf.mxu0
      %v873 = vpop.f32.mrf.mxu0
      %v874 = vadd.f32 %v737, %v873
      %v875 = vpop.f32.mrf.mxu0
      %876 = vmatprep.mubr.bf16.mxu0 0
      %877 = vmatmul.mubr.bf16.gmra.mxu0 %v786
      %v878 = vpop.f32.mrf.mxu0
      %v879 = vadd.f32 %v737, %v878
      %v880 = vpop.f32.mrf.mxu0
      %v881 = vpop.f32.mrf.mxu0
      %v882 = vadd.f32 %v737, %v881
      %v883 = vpop.f32.mrf.mxu0
      %884 = vdwg.mxu0
      %v885 = vmax.f32 %v823, 0.0
      %v886 = vmax.f32 %v826, 0.0
      %v887 = vmax.f32 %v831, 0.0
      %v888 = vmax.f32 %v834, 0.0
      %v889 = vmax.f32 %v839, 0.0
      %v890 = vmax.f32 %v842, 0.0
      %v891 = vmax.f32 %v847, 0.0
      %v892 = vmax.f32 %v850, 0.0
      %v893 = vmax.f32 %v855, 0.0
      %v894 = vmax.f32 %v858, 0.0
      %v895 = vmax.f32 %v863, 0.0
      %v896 = vmax.f32 %v866, 0.0
      %v897 = vmax.f32 %v871, 0.0
      %v898 = vmax.f32 %v874, 0.0
      %v899 = vmax.f32 %v879, 0.0
      %v900 = vmax.f32 %v882, 0.0
      %v901 = vpack.c.bf16 %v886, %v885
      %v902 = vpack.c.bf16 %v888, %v887
      %v903 = vpack.c.bf16 %v890, %v889
      %v904 = vpack.c.bf16 %v892, %v891
      %v905 = vpack.c.bf16 %v894, %v893
      %v906 = vpack.c.bf16 %v896, %v895
      %v907 = vpack.c.bf16 %v898, %v897
      %v908 = vpack.c.bf16 %v900, %v899
      %v909 = vld [vmem:[%s5] sm:$0xf]
      %v910 = vld [vmem:[%s5 + $0x4] sm:$0xf]
      %v911 = vld [vmem:[%s5 + $0x8] sm:$0xf]
      %v912 = vld [vmem:[%s5 + $0xc] sm:$0xf]
      %v913 = vld [vmem:[%s5 + $0x10] sm:$0xf]
      %v914 = vld [vmem:[%s5 + $0x14] sm:$0xf]
      %v915 = vld [vmem:[%s5 + $0x18] sm:$0xf]
      %v916 = vld [vmem:[%s5 + $0x1c] sm:$0xf]
      %v917 = vld [vmem:[%s6] sm:$0x1]
      %v919 = vlaneseq
      %v920 = vshrl.u32 %v919, 7
      %v921 = vsub.s32 0, %v920
      %v922 = vrot.slane %v917, %v921
      %v932 = vunpack.c.l.b16 %v909
      %v933 = vunpack.c.l.b16 %v910
      %v934 = vunpack.c.l.b16 %v911
      %v935 = vunpack.c.l.b16 %v912
      %v936 = vunpack.c.l.b16 %v913
      %v937 = vunpack.c.l.b16 %v914
      %v938 = vunpack.c.l.b16 %v915
      %v939 = vunpack.c.l.b16 %v916
      %v940 = vpack.c.b16 %v933, %v932
      %v941 = vpack.c.b16 %v935, %v934
      %v942 = vpack.c.b16 %v937, %v936
      %v943 = vpack.c.b16 %v939, %v938
      %v949 = vsel %vm763, %v901, 0
      %v952 = vsel %vm763, %v902, 0
      %v955 = vsel %vm763, %v903, 0
      %v958 = vsel %vm763, %v904, 0
      %v961 = vsel %vm763, %v905, 0
      %v964 = vsel %vm763, %v906, 0
      %v967 = vsel %vm763, %v907, 0
      %v970 = vsel %vm763, %v908, 0
      %972 = vmatprep.subr.bf16.mxu0 0
      %973 = vmatpush1.bf16.msra.mxu0 0
      %974 = vmatprep.subr.bf16.mxu0 0
      %975 = vmatpush1.bf16.msra.mxu0 0
      %976 = vmatprep.subr.bf16.mxu0 0
      %977 = vmatpush1.bf16.msra.mxu0 0
      %978 = vmatprep.subr.bf16.mxu0 0
      %979 = vmatpush1.bf16.msra.mxu0 0
      %980 = vmatprep.subr.bf16.mxu0 0
      %981 = vmatpush1.bf16.msra.mxu0 %v943
      %982 = vmatprep.subr.bf16.mxu0 0
      %983 = vmatpush1.bf16.msra.mxu0 %v942
      %984 = vmatprep.subr.bf16.mxu0 0
      %985 = vmatpush1.bf16.msra.mxu0 %v941
      %986 = vmatprep.subr.bf16.mxu0 0
      %987 = vmatpush1.bf16.msra.mxu0 %v940
      %988 = vmatprep.subr.bf16.mxu0 0
      %989 = vmatpush2.bf16.msra.mxu0 0
      %990 = vmatprep.subr.bf16.mxu0 0
      %991 = vmatpush2.bf16.msra.mxu0 0
      %992 = vmatprep.subr.bf16.mxu0 0
      %993 = vmatpush2.bf16.msra.mxu0 0
      %994 = vmatprep.subr.bf16.mxu0 0
      %995 = vmatpush2.bf16.msra.mxu0 0
      %996 = vmatprep.subr.bf16.mxu0 0
      %997 = vmatpush2.bf16.msra.mxu0 0
      %998 = vmatprep.subr.bf16.mxu0 0
      %999 = vmatpush2.bf16.msra.mxu0 0
      %1000 = vmatprep.subr.bf16.mxu0 0
      %1001 = vmatpush2.bf16.msra.mxu0 0
      %1002 = vmatprep.subr.bf16.mxu0 0
      %1003 = vmatpush2.bf16.msra.mxu0 0
      %1004 = vmatprep.mubr.bf16.mxu0 0
      %1005 = vmatmul.mubr.bf16.gmra.mxu0 %v949
      %v1006 = vpop.f32.mrf.mxu0
      %v1007 = vadd.f32 %v922, %v1006
      %v1008 = vpop.f32.mrf.mxu0
      %v1009 = vpop.f32.mrf.mxu0
      %v1010 = vadd.f32 %v922, %v1009
      %v1011 = vpop.f32.mrf.mxu0
      %1012 = vmatprep.mubr.bf16.mxu0 0
      %1013 = vmatmul.mubr.bf16.gmra.mxu0 %v952
      %v1014 = vpop.f32.mrf.mxu0
      %v1015 = vadd.f32 %v922, %v1014
      %v1016 = vpop.f32.mrf.mxu0
      %v1017 = vpop.f32.mrf.mxu0
      %v1018 = vadd.f32 %v922, %v1017
      %v1019 = vpop.f32.mrf.mxu0
      %1020 = vmatprep.mubr.bf16.mxu0 0
      %1021 = vmatmul.mubr.bf16.gmra.mxu0 %v955
      %v1022 = vpop.f32.mrf.mxu0
      %v1023 = vadd.f32 %v922, %v1022
      %v1024 = vpop.f32.mrf.mxu0
      %v1025 = vpop.f32.mrf.mxu0
      %v1026 = vadd.f32 %v922, %v1025
      %v1027 = vpop.f32.mrf.mxu0
      %1028 = vmatprep.mubr.bf16.mxu0 0
      %1029 = vmatmul.mubr.bf16.gmra.mxu0 %v958
      %v1030 = vpop.f32.mrf.mxu0
      %v1031 = vadd.f32 %v922, %v1030
      %v1032 = vpop.f32.mrf.mxu0
      %v1033 = vpop.f32.mrf.mxu0
      %v1034 = vadd.f32 %v922, %v1033
      %v1035 = vpop.f32.mrf.mxu0
      %1036 = vmatprep.mubr.bf16.mxu0 0
      %1037 = vmatmul.mubr.bf16.gmra.mxu0 %v961
      %v1038 = vpop.f32.mrf.mxu0
      %v1039 = vadd.f32 %v922, %v1038
      %v1040 = vpop.f32.mrf.mxu0
      %v1041 = vpop.f32.mrf.mxu0
      %v1042 = vadd.f32 %v922, %v1041
      %v1043 = vpop.f32.mrf.mxu0
      %1044 = vmatprep.mubr.bf16.mxu0 0
      %1045 = vmatmul.mubr.bf16.gmra.mxu0 %v964
      %v1046 = vpop.f32.mrf.mxu0
      %v1047 = vadd.f32 %v922, %v1046
      %v1048 = vpop.f32.mrf.mxu0
      %v1049 = vpop.f32.mrf.mxu0
      %v1050 = vadd.f32 %v922, %v1049
      %v1051 = vpop.f32.mrf.mxu0
      %1052 = vmatprep.mubr.bf16.mxu0 0
      %1053 = vmatmul.mubr.bf16.gmra.mxu0 %v967
      %v1054 = vpop.f32.mrf.mxu0
      %v1055 = vadd.f32 %v922, %v1054
      %v1056 = vpop.f32.mrf.mxu0
      %v1057 = vpop.f32.mrf.mxu0
      %v1058 = vadd.f32 %v922, %v1057
      %v1059 = vpop.f32.mrf.mxu0
      %1060 = vmatprep.mubr.bf16.mxu0 0
      %1061 = vmatmul.mubr.bf16.gmra.mxu0 %v970
      %v1062 = vpop.f32.mrf.mxu0
      %v1063 = vadd.f32 %v922, %v1062
      %v1064 = vpop.f32.mrf.mxu0
      %v1065 = vpop.f32.mrf.mxu0
      %v1066 = vadd.f32 %v922, %v1065
      %v1067 = vpop.f32.mrf.mxu0
      %1068 = vdwg.mxu0
      %v1069 = vmax.f32 %v1007, 0.0
      %v1070 = vmax.f32 %v1010, 0.0
      %v1071 = vmax.f32 %v1015, 0.0
      %v1072 = vmax.f32 %v1018, 0.0
      %v1073 = vmax.f32 %v1023, 0.0
      %v1074 = vmax.f32 %v1026, 0.0
      %v1075 = vmax.f32 %v1031, 0.0
      %v1076 = vmax.f32 %v1034, 0.0
      %v1077 = vmax.f32 %v1039, 0.0
      %v1078 = vmax.f32 %v1042, 0.0
      %v1079 = vmax.f32 %v1047, 0.0
      %v1080 = vmax.f32 %v1050, 0.0
      %v1081 = vmax.f32 %v1055, 0.0
      %v1082 = vmax.f32 %v1058, 0.0
      %v1083 = vmax.f32 %v1063, 0.0
      %v1084 = vmax.f32 %v1066, 0.0
      %v1085 = vpack.c.bf16 %v1070, %v1069
      %v1086 = vpack.c.bf16 %v1072, %v1071
      %v1087 = vpack.c.bf16 %v1074, %v1073
      %v1088 = vpack.c.bf16 %v1076, %v1075
      %v1089 = vpack.c.bf16 %v1078, %v1077
      %v1090 = vpack.c.bf16 %v1080, %v1079
      %v1091 = vpack.c.bf16 %v1082, %v1081
      %v1092 = vpack.c.bf16 %v1084, %v1083
      %v1093 = vld [vmem:[%s7] sm:$0xf]
      %v1094 = vld [vmem:[%s7 + $0x4] sm:$0xf]
      %v1095 = vld [vmem:[%s7 + $0x8] sm:$0xf]
      %v1096 = vld [vmem:[%s7 + $0xc] sm:$0xf]
      %v1097 = vld [vmem:[%s7 + $0x10] sm:$0xf]
      %v1098 = vld [vmem:[%s7 + $0x14] sm:$0xf]
      %v1099 = vld [vmem:[%s8] sm:$0x1]
      %v1101 = vlaneseq
      %v1102 = vshrl.u32 %v1101, 7
      %v1103 = vsub.s32 0, %v1102
      %v1104 = vrot.slane %v1099, %v1103
      %v1112 = vunpack.c.l.b16 %v1093
      %v1113 = vunpack.c.l.b16 %v1094
      %v1114 = vunpack.c.l.b16 %v1095
      %v1115 = vunpack.c.l.b16 %v1096
      %v1116 = vunpack.c.l.b16 %v1097
      %v1117 = vunpack.c.l.b16 %v1098
      %v1118 = vpack.c.b16 %v1113, %v1112
      %v1119 = vpack.c.b16 %v1115, %v1114
      %v1120 = vpack.c.b16 %v1117, %v1116
      %vm1124 = vcmask 392192
      %v1126 = vsel %vm1124, %v1085, 0
      %v1129 = vsel %vm1124, %v1086, 0
      %v1132 = vsel %vm1124, %v1087, 0
      %v1135 = vsel %vm1124, %v1088, 0
      %v1138 = vsel %vm1124, %v1089, 0
      %v1141 = vsel %vm1124, %v1090, 0
      %v1144 = vsel %vm1124, %v1091, 0
      %v1147 = vsel %vm1124, %v1092, 0
      %1149 = vmatprep.subr.bf16.mxu0 0
      %1150 = vmatpush1.bf16.msra.mxu0 0
      %1151 = vmatprep.subr.bf16.mxu0 0
      %1152 = vmatpush1.bf16.msra.mxu0 0
      %1153 = vmatprep.subr.bf16.mxu0 0
      %1154 = vmatpush1.bf16.msra.mxu0 0
      %1155 = vmatprep.subr.bf16.mxu0 0
      %1156 = vmatpush1.bf16.msra.mxu0 0
      %1157 = vmatprep.subr.bf16.mxu0 0
      %1158 = vmatpush1.bf16.msra.mxu0 0
      %1159 = vmatprep.subr.bf16.mxu0 0
      %1160 = vmatpush1.bf16.msra.mxu0 %v1120
      %1161 = vmatprep.subr.bf16.mxu0 0
      %1162 = vmatpush1.bf16.msra.mxu0 %v1119
      %1163 = vmatprep.subr.bf16.mxu0 0
      %1164 = vmatpush1.bf16.msra.mxu0 %v1118
      %1165 = vmatprep.subr.bf16.mxu0 0
      %1166 = vmatpush2.bf16.msra.mxu0 0
      %1167 = vmatprep.subr.bf16.mxu0 0
      %1168 = vmatpush2.bf16.msra.mxu0 0
      %1169 = vmatprep.subr.bf16.mxu0 0
      %1170 = vmatpush2.bf16.msra.mxu0 0
      %1171 = vmatprep.subr.bf16.mxu0 0
      %1172 = vmatpush2.bf16.msra.mxu0 0
      %1173 = vmatprep.subr.bf16.mxu0 0
      %1174 = vmatpush2.bf16.msra.mxu0 0
      %1175 = vmatprep.subr.bf16.mxu0 0
      %1176 = vmatpush2.bf16.msra.mxu0 0
      %1177 = vmatprep.subr.bf16.mxu0 0
      %1178 = vmatpush2.bf16.msra.mxu0 0
      %1179 = vmatprep.subr.bf16.mxu0 0
      %1180 = vmatpush2.bf16.msra.mxu0 0
      %1181 = vmatprep.mubr.bf16.mxu0 0
      %1182 = vmatmul.mubr.bf16.gmra.mxu0 %v1126
      %v1183 = vpop.f32.mrf.mxu0
      %v1184 = vadd.f32 %v1104, %v1183
      %v1185 = vpop.f32.mrf.mxu0
      %v1186 = vpop.f32.mrf.mxu0
      %v1187 = vadd.f32 %v1104, %v1186
      %v1188 = vpop.f32.mrf.mxu0
      %1189 = vmatprep.mubr.bf16.mxu0 0
      %1190 = vmatmul.mubr.bf16.gmra.mxu0 %v1129
      %v1191 = vpop.f32.mrf.mxu0
      %v1192 = vadd.f32 %v1104, %v1191
      %v1193 = vpop.f32.mrf.mxu0
      %v1194 = vpop.f32.mrf.mxu0
      %v1195 = vadd.f32 %v1104, %v1194
      %v1196 = vpop.f32.mrf.mxu0
      %1197 = vmatprep.mubr.bf16.mxu0 0
      %1198 = vmatmul.mubr.bf16.gmra.mxu0 %v1132
      %v1199 = vpop.f32.mrf.mxu0
      %v1200 = vadd.f32 %v1104, %v1199
      %v1201 = vpop.f32.mrf.mxu0
      %v1202 = vpop.f32.mrf.mxu0
      %v1203 = vadd.f32 %v1104, %v1202
      %v1204 = vpop.f32.mrf.mxu0
      %1205 = vmatprep.mubr.bf16.mxu0 0
      %1206 = vmatmul.mubr.bf16.gmra.mxu0 %v1135
      %v1207 = vpop.f32.mrf.mxu0
      %v1208 = vadd.f32 %v1104, %v1207
      %v1209 = vpop.f32.mrf.mxu0
      %v1210 = vpop.f32.mrf.mxu0
      %v1211 = vadd.f32 %v1104, %v1210
      %v1212 = vpop.f32.mrf.mxu0
      %1213 = vmatprep.mubr.bf16.mxu0 0
      %1214 = vmatmul.mubr.bf16.gmra.mxu0 %v1138
      %v1215 = vpop.f32.mrf.mxu0
      %v1216 = vadd.f32 %v1104, %v1215
      %v1217 = vpop.f32.mrf.mxu0
      %v1218 = vpop.f32.mrf.mxu0
      %v1219 = vadd.f32 %v1104, %v1218
      %v1220 = vpop.f32.mrf.mxu0
      %1221 = vmatprep.mubr.bf16.mxu0 0
      %1222 = vmatmul.mubr.bf16.gmra.mxu0 %v1141
      %v1223 = vpop.f32.mrf.mxu0
      %v1224 = vadd.f32 %v1104, %v1223
      %v1225 = vpop.f32.mrf.mxu0
      %v1226 = vpop.f32.mrf.mxu0
      %v1227 = vadd.f32 %v1104, %v1226
      %v1228 = vpop.f32.mrf.mxu0
      %1229 = vmatprep.mubr.bf16.mxu0 0
      %1230 = vmatmul.mubr.bf16.gmra.mxu0 %v1144
      %v1231 = vpop.f32.mrf.mxu0
      %v1232 = vadd.f32 %v1104, %v1231
      %v1233 = vpop.f32.mrf.mxu0
      %v1234 = vpop.f32.mrf.mxu0
      %v1235 = vadd.f32 %v1104, %v1234
      %v1236 = vpop.f32.mrf.mxu0
      %1237 = vmatprep.mubr.bf16.mxu0 0
      %1238 = vmatmul.mubr.bf16.gmra.mxu0 %v1147
      %v1239 = vpop.f32.mrf.mxu0
      %v1240 = vadd.f32 %v1104, %v1239
      %v1241 = vpop.f32.mrf.mxu0
      %v1242 = vpop.f32.mrf.mxu0
      %v1243 = vadd.f32 %v1104, %v1242
      %v1244 = vpop.f32.mrf.mxu0
      %1245 = vdwg.mxu0
      %v1246 = vmax.f32 %v1184, 0.0
      %v1247 = vmax.f32 %v1187, 0.0
      %v1248 = vmax.f32 %v1192, 0.0
      %v1249 = vmax.f32 %v1195, 0.0
      %v1250 = vmax.f32 %v1200, 0.0
      %v1251 = vmax.f32 %v1203, 0.0
      %v1252 = vmax.f32 %v1208, 0.0
      %v1253 = vmax.f32 %v1211, 0.0
      %v1254 = vmax.f32 %v1216, 0.0
      %v1255 = vmax.f32 %v1219, 0.0
      %v1256 = vmax.f32 %v1224, 0.0
      %v1257 = vmax.f32 %v1227, 0.0
      %v1258 = vmax.f32 %v1232, 0.0
      %v1259 = vmax.f32 %v1235, 0.0
      %v1260 = vmax.f32 %v1240, 0.0
      %v1261 = vmax.f32 %v1243, 0.0
      %v1262 = vpack.c.bf16 %v1247, %v1246
      %v1263 = vpack.c.bf16 %v1249, %v1248
      %v1264 = vpack.c.bf16 %v1251, %v1250
      %v1265 = vpack.c.bf16 %v1253, %v1252
      %v1266 = vpack.c.bf16 %v1255, %v1254
      %v1267 = vpack.c.bf16 %v1257, %v1256
      %v1268 = vpack.c.bf16 %v1259, %v1258
      %v1269 = vpack.c.bf16 %v1261, %v1260
      %v1270 = vld [vmem:[%s9] sm:$0xf]
      %v1271 = vld [vmem:[%s9 + $0x4] sm:$0xf]
      %v1272 = vld [vmem:[%s9 + $0x8] sm:$0xf]
      %v1273 = vld [vmem:[%s9 + $0xc] sm:$0xf]
      %v1274 = vld [vmem:[%s9 + $0x10] sm:$0xf]
      %v1275 = vld [vmem:[%s9 + $0x14] sm:$0xf]
      %v1276 = vld [vmem:[%s10] sm:$0x1]
      %v1278 = vlaneseq
      %v1279 = vshrl.u32 %v1278, 7
      %v1280 = vsub.s32 0, %v1279
      %v1281 = vrot.slane %v1276, %v1280
      %v1289 = vunpack.c.l.b16 %v1270
      %v1290 = vunpack.c.l.b16 %v1271
      %v1291 = vunpack.c.l.b16 %v1272
      %v1292 = vunpack.c.l.b16 %v1273
      %v1293 = vunpack.c.l.b16 %v1274
      %v1294 = vunpack.c.l.b16 %v1275
      %v1295 = vpack.c.b16 %v1290, %v1289
      %v1296 = vpack.c.b16 %v1292, %v1291
      %v1297 = vpack.c.b16 %v1294, %v1293
      %v1302 = vsel %vm1124, %v1262, 0
      %v1305 = vsel %vm1124, %v1263, 0
      %v1308 = vsel %vm1124, %v1264, 0
      %v1311 = vsel %vm1124, %v1265, 0
      %v1314 = vsel %vm1124, %v1266, 0
      %v1317 = vsel %vm1124, %v1267, 0
      %v1320 = vsel %vm1124, %v1268, 0
      %v1323 = vsel %vm1124, %v1269, 0
      %1325 = vmatprep.subr.bf16.mxu0 0
      %1326 = vmatpush1.bf16.msra.mxu0 0
      %1327 = vmatprep.subr.bf16.mxu0 0
      %1328 = vmatpush1.bf16.msra.mxu0 0
      %1329 = vmatprep.subr.bf16.mxu0 0
      %1330 = vmatpush1.bf16.msra.mxu0 0
      %1331 = vmatprep.subr.bf16.mxu0 0
      %1332 = vmatpush1.bf16.msra.mxu0 0
      %1333 = vmatprep.subr.bf16.mxu0 0
      %1334 = vmatpush1.bf16.msra.mxu0 0
      %1335 = vmatprep.subr.bf16.mxu0 0
      %1336 = vmatpush1.bf16.msra.mxu0 %v1297
      %1337 = vmatprep.subr.bf16.mxu0 0
      %1338 = vmatpush1.bf16.msra.mxu0 %v1296
      %1339 = vmatprep.subr.bf16.mxu0 0
      %1340 = vmatpush1.bf16.msra.mxu0 %v1295
      %1341 = vmatprep.subr.bf16.mxu0 0
      %1342 = vmatpush2.bf16.msra.mxu0 0
      %1343 = vmatprep.subr.bf16.mxu0 0
      %1344 = vmatpush2.bf16.msra.mxu0 0
      %1345 = vmatprep.subr.bf16.mxu0 0
      %1346 = vmatpush2.bf16.msra.mxu0 0
      %1347 = vmatprep.subr.bf16.mxu0 0
      %1348 = vmatpush2.bf16.msra.mxu0 0
      %1349 = vmatprep.subr.bf16.mxu0 0
      %1350 = vmatpush2.bf16.msra.mxu0 0
      %1351 = vmatprep.subr.bf16.mxu0 0
      %1352 = vmatpush2.bf16.msra.mxu0 0
      %1353 = vmatprep.subr.bf16.mxu0 0
      %1354 = vmatpush2.bf16.msra.mxu0 0
      %1355 = vmatprep.subr.bf16.mxu0 0
      %1356 = vmatpush2.bf16.msra.mxu0 0
      %1357 = vmatprep.mubr.bf16.mxu0 0
      %1358 = vmatmul.mubr.bf16.gmra.mxu0 %v1302
      %v1359 = vpop.f32.mrf.mxu0
      %v1360 = vadd.f32 %v1281, %v1359
      %v1361 = vpop.f32.mrf.mxu0
      %v1362 = vpop.f32.mrf.mxu0
      %v1363 = vadd.f32 %v1281, %v1362
      %v1364 = vpop.f32.mrf.mxu0
      %1365 = vmatprep.mubr.bf16.mxu0 0
      %1366 = vmatmul.mubr.bf16.gmra.mxu0 %v1305
      %v1367 = vpop.f32.mrf.mxu0
      %v1368 = vadd.f32 %v1281, %v1367
      %v1369 = vpop.f32.mrf.mxu0
      %v1370 = vpop.f32.mrf.mxu0
      %v1371 = vadd.f32 %v1281, %v1370
      %v1372 = vpop.f32.mrf.mxu0
      %1373 = vmatprep.mubr.bf16.mxu0 0
      %1374 = vmatmul.mubr.bf16.gmra.mxu0 %v1308
      %v1375 = vpop.f32.mrf.mxu0
      %v1376 = vadd.f32 %v1281, %v1375
      %v1377 = vpop.f32.mrf.mxu0
      %v1378 = vpop.f32.mrf.mxu0
      %v1379 = vadd.f32 %v1281, %v1378
      %v1380 = vpop.f32.mrf.mxu0
      %1381 = vmatprep.mubr.bf16.mxu0 0
      %1382 = vmatmul.mubr.bf16.gmra.mxu0 %v1311
      %v1383 = vpop.f32.mrf.mxu0
      %v1384 = vadd.f32 %v1281, %v1383
      %v1385 = vpop.f32.mrf.mxu0
      %v1386 = vpop.f32.mrf.mxu0
      %v1387 = vadd.f32 %v1281, %v1386
      %v1388 = vpop.f32.mrf.mxu0
      %1389 = vmatprep.mubr.bf16.mxu0 0
      %1390 = vmatmul.mubr.bf16.gmra.mxu0 %v1314
      %v1391 = vpop.f32.mrf.mxu0
      %v1392 = vadd.f32 %v1281, %v1391
      %v1393 = vpop.f32.mrf.mxu0
      %v1394 = vpop.f32.mrf.mxu0
      %v1395 = vadd.f32 %v1281, %v1394
      %v1396 = vpop.f32.mrf.mxu0
      %1397 = vmatprep.mubr.bf16.mxu0 0
      %1398 = vmatmul.mubr.bf16.gmra.mxu0 %v1317
      %v1399 = vpop.f32.mrf.mxu0
      %v1400 = vadd.f32 %v1281, %v1399
      %v1401 = vpop.f32.mrf.mxu0
      %v1402 = vpop.f32.mrf.mxu0
      %v1403 = vadd.f32 %v1281, %v1402
      %v1404 = vpop.f32.mrf.mxu0
      %1405 = vmatprep.mubr.bf16.mxu0 0
      %1406 = vmatmul.mubr.bf16.gmra.mxu0 %v1320
      %v1407 = vpop.f32.mrf.mxu0
      %v1408 = vadd.f32 %v1281, %v1407
      %v1409 = vpop.f32.mrf.mxu0
      %v1410 = vpop.f32.mrf.mxu0
      %v1411 = vadd.f32 %v1281, %v1410
      %v1412 = vpop.f32.mrf.mxu0
      %1413 = vmatprep.mubr.bf16.mxu0 0
      %1414 = vmatmul.mubr.bf16.gmra.mxu0 %v1323
      %v1415 = vpop.f32.mrf.mxu0
      %v1416 = vadd.f32 %v1281, %v1415
      %v1417 = vpop.f32.mrf.mxu0
      %v1418 = vpop.f32.mrf.mxu0
      %v1419 = vadd.f32 %v1281, %v1418
      %v1420 = vpop.f32.mrf.mxu0
      %1421 = vdwg.mxu0
      %v1422 = vmax.f32 %v1360, 0.0
      %v1423 = vmax.f32 %v1363, 0.0
      %v1424 = vmax.f32 %v1368, 0.0
      %v1425 = vmax.f32 %v1371, 0.0
      %v1426 = vmax.f32 %v1376, 0.0
      %v1427 = vmax.f32 %v1379, 0.0
      %v1428 = vmax.f32 %v1384, 0.0
      %v1429 = vmax.f32 %v1387, 0.0
      %v1430 = vmax.f32 %v1392, 0.0
      %v1431 = vmax.f32 %v1395, 0.0
      %v1432 = vmax.f32 %v1400, 0.0
      %v1433 = vmax.f32 %v1403, 0.0
      %v1434 = vmax.f32 %v1408, 0.0
      %v1435 = vmax.f32 %v1411, 0.0
      %v1436 = vmax.f32 %v1416, 0.0
      %v1437 = vmax.f32 %v1419, 0.0
      %v1438 = vpack.c.bf16 %v1423, %v1422
      %v1439 = vpack.c.bf16 %v1425, %v1424
      %v1440 = vpack.c.bf16 %v1427, %v1426
      %v1441 = vpack.c.bf16 %v1429, %v1428
      %v1442 = vpack.c.bf16 %v1431, %v1430
      %v1443 = vpack.c.bf16 %v1433, %v1432
      %v1444 = vpack.c.bf16 %v1435, %v1434
      %v1445 = vpack.c.bf16 %v1437, %v1436
      %v1446 = vld [vmem:[%s11] sm:$0xf]
      %v1447 = vld [vmem:[%s11 + $0x4] sm:$0xf]
      %v1448 = vld [vmem:[%s11 + $0x8] sm:$0xf]
      %v1449 = vld [vmem:[%s11 + $0xc] sm:$0xf]
      %v1450 = vld [vmem:[%s12] sm:$0x1]
      %v1452 = vlaneseq
      %v1453 = vshrl.u32 %v1452, 7
      %v1454 = vsub.s32 0, %v1453
      %v1455 = vrot.slane %v1450, %v1454
      %v1461 = vunpack.c.l.b16 %v1446
      %v1462 = vunpack.c.l.b16 %v1447
      %v1463 = vunpack.c.l.b16 %v1448
      %v1464 = vunpack.c.l.b16 %v1449
      %v1465 = vpack.c.b16 %v1462, %v1461
      %v1466 = vpack.c.b16 %v1464, %v1463
      %v1470 = vsel %vm578, %v1438, 0
      %v1473 = vsel %vm578, %v1439, 0
      %v1476 = vsel %vm578, %v1440, 0
      %v1479 = vsel %vm578, %v1441, 0
      %v1482 = vsel %vm578, %v1442, 0
      %v1485 = vsel %vm578, %v1443, 0
      %v1488 = vsel %vm578, %v1444, 0
      %v1491 = vsel %vm578, %v1445, 0
      %1493 = vmatprep.subr.bf16.mxu0 0
      %1494 = vmatpush1.bf16.msra.mxu0 0
      %1495 = vmatprep.subr.bf16.mxu0 0
      %1496 = vmatpush1.bf16.msra.mxu0 0
      %1497 = vmatprep.subr.bf16.mxu0 0
      %1498 = vmatpush1.bf16.msra.mxu0 0
      %1499 = vmatprep.subr.bf16.mxu0 0
      %1500 = vmatpush1.bf16.msra.mxu0 0
      %1501 = vmatprep.subr.bf16.mxu0 0
      %1502 = vmatpush1.bf16.msra.mxu0 0
      %1503 = vmatprep.subr.bf16.mxu0 0
      %1504 = vmatpush1.bf16.msra.mxu0 0
      %1505 = vmatprep.subr.bf16.mxu0 0
      %1506 = vmatpush1.bf16.msra.mxu0 %v1466
      %1507 = vmatprep.subr.bf16.mxu0 0
      %1508 = vmatpush1.bf16.msra.mxu0 %v1465
      %1509 = vmatprep.subr.bf16.mxu0 0
      %1510 = vmatpush2.bf16.msra.mxu0 0
      %1511 = vmatprep.subr.bf16.mxu0 0
      %1512 = vmatpush2.bf16.msra.mxu0 0
      %1513 = vmatprep.subr.bf16.mxu0 0
      %1514 = vmatpush2.bf16.msra.mxu0 0
      %1515 = vmatprep.subr.bf16.mxu0 0
      %1516 = vmatpush2.bf16.msra.mxu0 0
      %1517 = vmatprep.subr.bf16.mxu0 0
      %1518 = vmatpush2.bf16.msra.mxu0 0
      %1519 = vmatprep.subr.bf16.mxu0 0
      %1520 = vmatpush2.bf16.msra.mxu0 0
      %1521 = vmatprep.subr.bf16.mxu0 0
      %1522 = vmatpush2.bf16.msra.mxu0 0
      %1523 = vmatprep.subr.bf16.mxu0 0
      %1524 = vmatpush2.bf16.msra.mxu0 0
      %1525 = vmatprep.mubr.bf16.mxu0 0
      %1526 = vmatmul.mubr.bf16.gmra.mxu0 %v1470
      %v1527 = vpop.f32.mrf.mxu0
      %v1528 = vadd.f32 %v1455, %v1527
      %v1529 = vpop.f32.mrf.mxu0
      %v1530 = vpop.f32.mrf.mxu0
      %v1531 = vadd.f32 %v1455, %v1530
      %v1532 = vpop.f32.mrf.mxu0
      %1533 = vmatprep.mubr.bf16.mxu0 0
      %1534 = vmatmul.mubr.bf16.gmra.mxu0 %v1473
      %v1535 = vpop.f32.mrf.mxu0
      %v1536 = vadd.f32 %v1455, %v1535
      %v1537 = vpop.f32.mrf.mxu0
      %v1538 = vpop.f32.mrf.mxu0
      %v1539 = vadd.f32 %v1455, %v1538
      %v1540 = vpop.f32.mrf.mxu0
      %1541 = vmatprep.mubr.bf16.mxu0 0
      %1542 = vmatmul.mubr.bf16.gmra.mxu0 %v1476
      %v1543 = vpop.f32.mrf.mxu0
      %v1544 = vadd.f32 %v1455, %v1543
      %v1545 = vpop.f32.mrf.mxu0
      %v1546 = vpop.f32.mrf.mxu0
      %v1547 = vadd.f32 %v1455, %v1546
      %v1548 = vpop.f32.mrf.mxu0
      %1549 = vmatprep.mubr.bf16.mxu0 0
      %1550 = vmatmul.mubr.bf16.gmra.mxu0 %v1479
      %v1551 = vpop.f32.mrf.mxu0
      %v1552 = vadd.f32 %v1455, %v1551
      %v1553 = vpop.f32.mrf.mxu0
      %v1554 = vpop.f32.mrf.mxu0
      %v1555 = vadd.f32 %v1455, %v1554
      %v1556 = vpop.f32.mrf.mxu0
      %1557 = vmatprep.mubr.bf16.mxu0 0
      %1558 = vmatmul.mubr.bf16.gmra.mxu0 %v1482
      %v1559 = vpop.f32.mrf.mxu0
      %v1560 = vadd.f32 %v1455, %v1559
      %v1561 = vpop.f32.mrf.mxu0
      %v1562 = vpop.f32.mrf.mxu0
      %v1563 = vadd.f32 %v1455, %v1562
      %v1564 = vpop.f32.mrf.mxu0
      %1565 = vmatprep.mubr.bf16.mxu0 0
      %1566 = vmatmul.mubr.bf16.gmra.mxu0 %v1485
      %v1567 = vpop.f32.mrf.mxu0
      %v1568 = vadd.f32 %v1455, %v1567
      %v1569 = vpop.f32.mrf.mxu0
      %v1570 = vpop.f32.mrf.mxu0
      %v1571 = vadd.f32 %v1455, %v1570
      %v1572 = vpop.f32.mrf.mxu0
      %1573 = vmatprep.mubr.bf16.mxu0 0
      %1574 = vmatmul.mubr.bf16.gmra.mxu0 %v1488
      %v1575 = vpop.f32.mrf.mxu0
      %v1576 = vadd.f32 %v1455, %v1575
      %v1577 = vpop.f32.mrf.mxu0
      %v1578 = vpop.f32.mrf.mxu0
      %v1579 = vadd.f32 %v1455, %v1578
      %v1580 = vpop.f32.mrf.mxu0
      %1581 = vmatprep.mubr.bf16.mxu0 0
      %1582 = vmatmul.mubr.bf16.gmra.mxu0 %v1491
      %v1583 = vpop.f32.mrf.mxu0
      %v1584 = vadd.f32 %v1455, %v1583
      %v1585 = vpop.f32.mrf.mxu0
      %v1586 = vpop.f32.mrf.mxu0
      %v1587 = vadd.f32 %v1455, %v1586
      %v1588 = vpop.f32.mrf.mxu0
      %1589 = vdwg.mxu0
      %v1590 = vmax.f32 %v1528, 0.0
      %v1591 = vmax.f32 %v1531, 0.0
      %v1592 = vmax.f32 %v1536, 0.0
      %v1593 = vmax.f32 %v1539, 0.0
      %v1594 = vmax.f32 %v1544, 0.0
      %v1595 = vmax.f32 %v1547, 0.0
      %v1596 = vmax.f32 %v1552, 0.0
      %v1597 = vmax.f32 %v1555, 0.0
      %v1598 = vmax.f32 %v1560, 0.0
      %v1599 = vmax.f32 %v1563, 0.0
      %v1600 = vmax.f32 %v1568, 0.0
      %v1601 = vmax.f32 %v1571, 0.0
      %v1602 = vmax.f32 %v1576, 0.0
      %v1603 = vmax.f32 %v1579, 0.0
      %v1604 = vmax.f32 %v1584, 0.0
      %v1605 = vmax.f32 %v1587, 0.0
      %v1606 = vpack.c.bf16 %v1591, %v1590
      %v1607 = vpack.c.bf16 %v1593, %v1592
      %v1608 = vpack.c.bf16 %v1595, %v1594
      %v1609 = vpack.c.bf16 %v1597, %v1596
      %v1610 = vpack.c.bf16 %v1599, %v1598
      %v1611 = vpack.c.bf16 %v1601, %v1600
      %v1612 = vpack.c.bf16 %v1603, %v1602
      %v1613 = vpack.c.bf16 %v1605, %v1604
      %v1614 = vld [vmem:[%s13] sm:$0xf]
      %v1615 = vld [vmem:[%s13 + $0x4] sm:$0xf]
      %v1616 = vld [vmem:[%s13 + $0x8] sm:$0xf]
      %v1617 = vld [vmem:[%s13 + $0xc] sm:$0xf]
      %v1618 = vld [vmem:[%s14] sm:$0x1]
      %v1620 = vlaneseq
      %v1621 = vshrl.u32 %v1620, 7
      %v1622 = vsub.s32 0, %v1621
      %v1623 = vrot.slane %v1618, %v1622
      %v1629 = vunpack.c.l.b16 %v1614
      %v1630 = vunpack.c.l.b16 %v1615
      %v1631 = vunpack.c.l.b16 %v1616
      %v1632 = vunpack.c.l.b16 %v1617
      %v1633 = vpack.c.b16 %v1630, %v1629
      %v1634 = vpack.c.b16 %v1632, %v1631
      %v1638 = vsel %vm578, %v1606, 0
      %v1641 = vsel %vm578, %v1607, 0
      %v1644 = vsel %vm578, %v1608, 0
      %v1647 = vsel %vm578, %v1609, 0
      %v1650 = vsel %vm578, %v1610, 0
      %v1653 = vsel %vm578, %v1611, 0
      %v1656 = vsel %vm578, %v1612, 0
      %v1659 = vsel %vm578, %v1613, 0
      %1661 = vmatprep.subr.bf16.mxu0 0
      %1662 = vmatpush1.bf16.msra.mxu0 0
      %1663 = vmatprep.subr.bf16.mxu0 0
      %1664 = vmatpush1.bf16.msra.mxu0 0
      %1665 = vmatprep.subr.bf16.mxu0 0
      %1666 = vmatpush1.bf16.msra.mxu0 0
      %1667 = vmatprep.subr.bf16.mxu0 0
      %1668 = vmatpush1.bf16.msra.mxu0 0
      %1669 = vmatprep.subr.bf16.mxu0 0
      %1670 = vmatpush1.bf16.msra.mxu0 0
      %1671 = vmatprep.subr.bf16.mxu0 0
      %1672 = vmatpush1.bf16.msra.mxu0 0
      %1673 = vmatprep.subr.bf16.mxu0 0
      %1674 = vmatpush1.bf16.msra.mxu0 %v1634
      %1675 = vmatprep.subr.bf16.mxu0 0
      %1676 = vmatpush1.bf16.msra.mxu0 %v1633
      %1677 = vmatprep.subr.bf16.mxu0 0
      %1678 = vmatpush2.bf16.msra.mxu0 0
      %1679 = vmatprep.subr.bf16.mxu0 0
      %1680 = vmatpush2.bf16.msra.mxu0 0
      %1681 = vmatprep.subr.bf16.mxu0 0
      %1682 = vmatpush2.bf16.msra.mxu0 0
      %1683 = vmatprep.subr.bf16.mxu0 0
      %1684 = vmatpush2.bf16.msra.mxu0 0
      %1685 = vmatprep.subr.bf16.mxu0 0
      %1686 = vmatpush2.bf16.msra.mxu0 0
      %1687 = vmatprep.subr.bf16.mxu0 0
      %1688 = vmatpush2.bf16.msra.mxu0 0
      %1689 = vmatprep.subr.bf16.mxu0 0
      %1690 = vmatpush2.bf16.msra.mxu0 0
      %1691 = vmatprep.subr.bf16.mxu0 0
      %1692 = vmatpush2.bf16.msra.mxu0 0
      %1693 = vmatprep.mubr.bf16.mxu0 0
      %1694 = vmatmul.mubr.bf16.gmra.mxu0 %v1638
      %v1695 = vpop.f32.mrf.mxu0
      %v1696 = vadd.f32 %v1623, %v1695
      %v1697 = vpop.f32.mrf.mxu0
      %v1698 = vpop.f32.mrf.mxu0
      %v1699 = vadd.f32 %v1623, %v1698
      %v1700 = vpop.f32.mrf.mxu0
      %1701 = vmatprep.mubr.bf16.mxu0 0
      %1702 = vmatmul.mubr.bf16.gmra.mxu0 %v1641
      %v1703 = vpop.f32.mrf.mxu0
      %v1704 = vadd.f32 %v1623, %v1703
      %v1705 = vpop.f32.mrf.mxu0
      %v1706 = vpop.f32.mrf.mxu0
      %v1707 = vadd.f32 %v1623, %v1706
      %v1708 = vpop.f32.mrf.mxu0
      %1709 = vmatprep.mubr.bf16.mxu0 0
      %1710 = vmatmul.mubr.bf16.gmra.mxu0 %v1644
      %v1711 = vpop.f32.mrf.mxu0
      %v1712 = vadd.f32 %v1623, %v1711
      %v1713 = vpop.f32.mrf.mxu0
      %v1714 = vpop.f32.mrf.mxu0
      %v1715 = vadd.f32 %v1623, %v1714
      %v1716 = vpop.f32.mrf.mxu0
      %1717 = vmatprep.mubr.bf16.mxu0 0
      %1718 = vmatmul.mubr.bf16.gmra.mxu0 %v1647
      %v1719 = vpop.f32.mrf.mxu0
      %v1720 = vadd.f32 %v1623, %v1719
      %v1721 = vpop.f32.mrf.mxu0
      %v1722 = vpop.f32.mrf.mxu0
      %v1723 = vadd.f32 %v1623, %v1722
      %v1724 = vpop.f32.mrf.mxu0
      %1725 = vmatprep.mubr.bf16.mxu0 0
      %1726 = vmatmul.mubr.bf16.gmra.mxu0 %v1650
      %v1727 = vpop.f32.mrf.mxu0
      %v1728 = vadd.f32 %v1623, %v1727
      %v1729 = vpop.f32.mrf.mxu0
      %v1730 = vpop.f32.mrf.mxu0
      %v1731 = vadd.f32 %v1623, %v1730
      %v1732 = vpop.f32.mrf.mxu0
      %1733 = vmatprep.mubr.bf16.mxu0 0
      %1734 = vmatmul.mubr.bf16.gmra.mxu0 %v1653
      %v1735 = vpop.f32.mrf.mxu0
      %v1736 = vadd.f32 %v1623, %v1735
      %v1737 = vpop.f32.mrf.mxu0
      %v1738 = vpop.f32.mrf.mxu0
      %v1739 = vadd.f32 %v1623, %v1738
      %v1740 = vpop.f32.mrf.mxu0
      %1741 = vmatprep.mubr.bf16.mxu0 0
      %1742 = vmatmul.mubr.bf16.gmra.mxu0 %v1656
      %v1743 = vpop.f32.mrf.mxu0
      %v1744 = vadd.f32 %v1623, %v1743
      %v1745 = vpop.f32.mrf.mxu0
      %v1746 = vpop.f32.mrf.mxu0
      %v1747 = vadd.f32 %v1623, %v1746
      %v1748 = vpop.f32.mrf.mxu0
      %1749 = vmatprep.mubr.bf16.mxu0 0
      %1750 = vmatmul.mubr.bf16.gmra.mxu0 %v1659
      %v1751 = vpop.f32.mrf.mxu0
      %v1752 = vadd.f32 %v1623, %v1751
      %v1753 = vpop.f32.mrf.mxu0
      %v1754 = vpop.f32.mrf.mxu0
      %v1755 = vadd.f32 %v1623, %v1754
      %v1756 = vpop.f32.mrf.mxu0
      %1757 = vdwg.mxu0
      %vm1758 = vcmask 64512
      %1759 = vst.msk [vmem:[%s496] sm:$0xff] %vm1758, %v1696
      %1760 = vst.msk [vmem:[%s496 + $0x8] sm:$0xff] %vm1758, %v1699
      %1761 = vst.msk [vmem:[%s496 + $0x10] sm:$0xff] %vm1758, %v1704
      %1762 = vst.msk [vmem:[%s496 + $0x18] sm:$0xff] %vm1758, %v1707
      %1763 = vst.msk [vmem:[%s496 + $0x20] sm:$0xff] %vm1758, %v1712
      %1764 = vst.msk [vmem:[%s496 + $0x28] sm:$0xff] %vm1758, %v1715
      %1765 = vst.msk [vmem:[%s496 + $0x30] sm:$0xff] %vm1758, %v1720
      %1766 = vst.msk [vmem:[%s496 + $0x38] sm:$0xff] %vm1758, %v1723
      %1767 = vst.msk [vmem:[%s496 + $0x40] sm:$0xff] %vm1758, %v1728
      %1768 = vst.msk [vmem:[%s496 + $0x48] sm:$0xff] %vm1758, %v1731
      %1769 = vst.msk [vmem:[%s496 + $0x50] sm:$0xff] %vm1758, %v1736
      %1770 = vst.msk [vmem:[%s496 + $0x58] sm:$0xff] %vm1758, %v1739
      %1771 = vst.msk [vmem:[%s496 + $0x60] sm:$0xff] %vm1758, %v1744
      %1772 = vst.msk [vmem:[%s496 + $0x68] sm:$0xff] %vm1758, %v1747
      %1773 = vst.msk [vmem:[%s496 + $0x70] sm:$0xff] %vm1758, %v1752
      %1774 = vst.msk [vmem:[%s496 + $0x78] sm:$0xff] %vm1758, %v1755
      %s1775 = smul.u32 16, %s26
      %p1776 = scmp.lt.s32.totalorder %s1775, 63
      %s1777 = scalar_select %p1776, %s1775, 63
      %s1778 = smul.addr %s1777, 8
      %s1779 = scalar_lea.vmem %s15, %s1778
      // Predicated region
      $region81: #{tpu_custom_call.1} parent=79 // pred_check
        %p1780 = pneg %p364
      $region82: #{tpu_custom_call.1} parent=79 // pred_check_branch
        %1782 = sbr.rel (%p1780) target = $region84
      $region83: #{tpu_custom_call.1} parent=79 // pred_region
        %s1783 = smul.u32 16, %s26
      $region84: #{tpu_custom_call.1} parent=79 // pred_fallthru
        _
    $region80: #{tpu_custom_call.1} parent=5 // pred_fallthru
      _
    %p1784 = scmp.le.s32.totalorder 2, %s21
    // Predicated region
    $region85: #{tpu_custom_call.1} parent=5 // pred_check
      %p1785 = pneg %p1784
    $region86: #{tpu_custom_call.1} parent=5 // pred_check_branch
      %1787 = sbr.rel (%p1785) target = $region88
    $region87: #{tpu_custom_call.1} parent=5 // pred_region
      %s1788 = ssub.s32 %s21, 2
      // Predicated region
      $region89: #{tpu_custom_call.1} parent=87 // pred_check
        %p1789 = pneg %p370
      $region90: #{tpu_custom_call.1} parent=87 // pred_check_branch
        %1791 = sbr.rel (%p1789) target = $region92
      $region91: #{tpu_custom_call.1} parent=87 // pred_region
        %s1792 = smul.u32 16, %s27
        %p1793 = scmp.lt.s32.totalorder %s1792, 63
        %s1794 = scalar_select %p1793, %s1792, 63
        %s1795 = smul.addr %s1794, 8
        %s1796 = scalar_lea.vmem %s15, %s1795
      $region92: #{tpu_custom_call.1} parent=87 // pred_fallthru
        _
    $region88: #{tpu_custom_call.1} parent=5 // pred_fallthru
      _
  $region6: #{tpu_custom_call.1} parent=0 // loop_footer
    %s25 = sadd.s32 1, %s21
  $region7: #{tpu_custom_call.1} parent=0 // loop_footer_branch
    %20 = sbr.rel target = $region3
  $region8: #{tpu_custom_call.1} parent=0 // loop_exit
    _

</llo_original>
